<compile_context>
chip_gen: v5e
topology: v5e:2x2
jax: 0.10.0
libtpu: 0.0.40
codegen_flags: <defaults>
</compile_context>

<pallas_src>
import functools
import math

import jax
import jax.numpy as jnp
from jax import lax
from jax.experimental import pallas as pl
from jax.experimental.pallas import tpu as pltpu


def _depthsep_kernel(x_ref, wdw_ref, bdw_ref, wpw_ref, bpw_ref, o_ref, ximg_ref,
                     *, mxu_dtype):
    # x_ref    : (C, H, W)      one input image, NCHW layout (no host transpose)
    # wdw_ref  : (K*K, C, 1)    depthwise taps (BN scale folded), row kh*K+kw
    # bdw_ref  : (C, 1)         depthwise folded bias (conv bias + BN)
    # bpw_ref  : (Cout, 1)      pointwise folded bias
    # wpw_ref  : (Cout, C)      pointwise weights (BN scale folded)
    # o_ref    : (Cout, TH*Wo)  one output strip, channel-major, lane-dense
    # ximg_ref : (Hp, C, Wp)    per-image zero-padded scratch, W on the lane axis
    C, H, W = x_ref.shape
    Hp, _, Wp = ximg_ref.shape
    pad = (Hp - H) // 2
    K2 = wdw_ref.shape[0]
    K = int(round(math.sqrt(K2)))
    assert K * K == K2, "depthwise kernel must be square"
    Wo = Wp - (K - 1)
    Cout, S = o_ref.shape
    assert S % Wo == 0
    TH = S // Wo

    i = pl.program_id(1)

    # Build the zero-padded, (rows, C, W)-ordered copy of the image once per
    # image (on its first strip).  This replaces the host-side NCHW->NHWC
    # transpose + jnp.pad (extra HBM passes) with a single in-VMEM copy.
    @pl.when(i == 0)
    def _init():
        ximg_ref[...] = jnp.zeros_like(ximg_ref)
        ximg_ref[pad:pad + H, :, pad:pad + W] = jnp.transpose(x_ref[...], (1, 0, 2))

    # Padded-image rows needed by this strip: [i*TH, i*TH + TH + K - 1).
    r0 = i * TH
    if TH % 8 == 0:
        r0 = pl.multiple_of(r0, 8)
    xwin = ximg_ref[pl.ds(r0, TH + K - 1), :, :]              # (TH+K-1, C, Wp)

    # ---- depthwise KxK conv: shift-and-accumulate on the VPU ----
    # W on lanes -> lane-dense VPU work independent of C.  kw is a static lane
    # slice (K per strip, hoisted out of the kh loop; lowers to lane shifts on
    # otherwise-idle XLU/ld-st slots); kh slices the leading axis (free).
    acc = jnp.zeros((TH, C, Wo), jnp.float32)
    for kw in range(K):
        x_kw = xwin[:, :, kw:kw + Wo]                         # (TH+K-1, C, Wo)
        for kh in range(K):
            acc = acc + x_kw[kh:kh + TH] * wdw_ref[kh * K + kw]   # (C,1) bcast

    # folded-BN bias + ReLU (scale already folded into the taps host-side)
    y = jnp.maximum(acc + bdw_ref[...], 0.0)                  # (TH, C, Wo)

    # Re-pack to channel-major (C, TH*Wo): the only relayout in the kernel,
    # paid on the (smaller) activation instead of the output, so the pointwise
    # matmul is canonical and the store is channel-major + lane-dense.
    rhs = jnp.concatenate([y[t] for t in range(TH)], axis=1)  # (C, TH*Wo)

    # ---- pointwise 1x1 conv on the MXU: (Cout, C) x (C, TH*Wo) ----
    z = jnp.dot(wpw_ref[...].astype(mxu_dtype), rhs.astype(mxu_dtype),
                preferred_element_type=jnp.float32)           # (Cout, TH*Wo)
    z = jnp.maximum(z + bpw_ref[...], 0.0)
    o_ref[...] = z.astype(o_ref.dtype)


def depth_separable_conv2d(x_nchw, w_dw, b_dw, w_pw, b_pw, *,
                           kernel_size=3, padding=1, strip_rows=32,
                           mxu_dtype=jnp.float32,
                           vmem_limit_bytes=48 * 1024 * 1024):
    """Fused depthwise-separable conv; eval-mode BN already folded into (w, b).

    x_nchw : (N, C, H, W) f32   input, PyTorch NCHW layout (consumed directly)
    w_dw   : (K*K, C, 1)  depthwise taps (BN scale folded in), row kh*K+kw
    b_dw   : (C, 1)       depthwise bias (conv bias + BN folded)
    w_pw   : (Cout, C)    pointwise weights (BN scale folded in)
    b_pw   : (Cout, 1)    pointwise bias (conv bias + BN folded)
    Returns (N, Cout, Ho, Wo) f32.  Square kernel, stride 1, symmetric padding.
    """
    N, C, H, W = x_nchw.shape
    K = kernel_size
    assert K >= 1 and padding >= 0, "square kernel, stride 1, symmetric padding only"
    assert w_dw.shape == (K * K, C, 1), w_dw.shape
    assert b_dw.shape == (C, 1), b_dw.shape
    Cout = w_pw.shape[0]
    assert w_pw.shape == (Cout, C), w_pw.shape
    assert b_pw.shape == (Cout, 1), b_pw.shape
    Hp, Wp = H + 2 * padding, W + 2 * padding
    Ho, Wo = Hp - (K - 1), Wp - (K - 1)
    assert Ho >= 1 and Wo >= 1, "kernel larger than padded input"

    # Strip size: largest divisor of Ho that fits strip_rows, preferring a
    # lane-dense output strip (TH*Wo multiple of 128).
    divs = [d for d in range(1, Ho + 1) if Ho % d == 0 and d <= max(1, strip_rows)]
    dense = [d for d in divs if (d * Wo) % 128 == 0]
    TH = max(dense) if dense else max(divs)
    n_strips = Ho // TH

    # Whole (padded) image is resident in VMEM per sample: check the budget.
    est_vmem = 4 * (2 * C * H * W + Hp * C * Wp + 2 * Cout * TH * Wo
                    + K * K * C + C * Cout + C + Cout)
    assert est_vmem < vmem_limit_bytes, (
        f"per-image VMEM working set {est_vmem} B exceeds vmem_limit_bytes; "
        "shrink the image or raise the limit")

    cost = pl.CostEstimate(
        flops=2 * N * Ho * Wo * (K * K * C + C * Cout),
        transcendentals=0,
        bytes_accessed=4 * (N * C * H * W + N * Cout * Ho * Wo
                            + K * K * C + C * Cout + C + Cout))

    out = pl.pallas_call(
        functools.partial(_depthsep_kernel, mxu_dtype=mxu_dtype),
        out_shape=jax.ShapeDtypeStruct((N, Cout, Ho * Wo), jnp.float32),
        grid_spec=pltpu.PrefetchScalarGridSpec(
            num_scalar_prefetch=0,
            grid=(N, n_strips),
            in_specs=[
                # whole image per sample, DMA'd once per n (index constant in i)
                pl.BlockSpec((None, C, H, W), lambda n, i: (n, 0, 0, 0)),
                pl.BlockSpec((K * K, C, 1), lambda n, i: (0, 0, 0)),
                pl.BlockSpec((C, 1), lambda n, i: (0, 0)),
                pl.BlockSpec((Cout, C), lambda n, i: (0, 0)),
                pl.BlockSpec((Cout, 1), lambda n, i: (0, 0)),
            ],
            out_specs=pl.BlockSpec((None, Cout, TH * Wo), lambda n, i: (n, 0, i)),
            scratch_shapes=[pltpu.VMEM((Hp, C, Wp), jnp.float32)],
        ),
        compiler_params=pltpu.CompilerParams(
            # batch is parallel (megacore); the strip axis carries the per-image
            # scratch dependency, so it must stay sequential ("arbitrary").
            dimension_semantics=("parallel", "arbitrary"),
            vmem_limit_bytes=vmem_limit_bytes),
        cost_estimate=cost,
    )(x_nchw, w_dw, b_dw, w_pw, b_pw)

    # Channel-major flat output -> NCHW via a free metadata reshape.
    # TODO(synk): optional bf16 output (halves vst/HBM writeback on v5e).
    return out.reshape(N, Cout, Ho, Wo)


def _fold_params(wdw_oihw, bdw, g1, be1, m1, v1, wpw_oihw, bpw, g2, be2, m2, v2, eps):
    """Fold eval-mode BN (scale into weights, shift into bias) host-side."""
    Cin = wdw_oihw.shape[0]
    K = wdw_oihw.shape[-1]
    Cout = wpw_oihw.shape[0]
    s1 = g1 / jnp.sqrt(v1 + eps)
    s2 = g2 / jnp.sqrt(v2 + eps)
    # depthwise taps -> (K*K, C, 1); row kh*K+kw holds tap (kh, kw) per channel
    w_dw = (jnp.transpose(wdw_oihw[:, 0], (1, 2, 0)).reshape(K * K, Cin)
            * s1[None, :])[..., None]
    b_dw = ((bdw - m1) * s1 + be1).reshape(Cin, 1)
    # pointwise -> (Cout, Cin); BN scale folded per output channel
    w_pw = wpw_oihw[:, :, 0, 0] * s2[:, None]
    b_pw = ((bpw - m2) * s2 + be2).reshape(Cout, 1)
    return w_dw, b_dw, w_pw, b_pw


def _reference(x_nchw, wdw_oihw, bdw, g1, be1, m1, v1, wpw_oihw, bpw, g2, be2, m2, v2, eps):
    # Pure-JAX reference matching PyTorch eval-mode semantics.
    y = lax.conv_general_dilated(
        x_nchw, wdw_oihw, window_strides=(1, 1), padding=((1, 1), (1, 1)),
        dimension_numbers=('NCHW', 'OIHW', 'NCHW'),
        feature_group_count=x_nchw.shape[1])
    y = y + bdw[None, :, None, None]
    y = (y - m1[None, :, None, None]) / jnp.sqrt(v1[None, :, None, None] + eps)
    y = y * g1[None, :, None, None] + be1[None, :, None, None]
    y = jnp.maximum(y, 0.0)
    z = lax.conv_general_dilated(
        y, wpw_oihw, window_strides=(1, 1), padding=((0, 0), (0, 0)),
        dimension_numbers=('NCHW', 'OIHW', 'NCHW'))
    z = z + bpw[None, :, None, None]
    z = (z - m2[None, :, None, None]) / jnp.sqrt(v2[None, :, None, None] + eps)
    z = z * g2[None, :, None, None] + be2[None, :, None, None]
    return jnp.maximum(z, 0.0)


if __name__ == "__main__":
    # Small, deterministic problem: N=2, Cin=4, H=W=16, Cout=8, kernel=3, pad=1.
    key = jax.random.PRNGKey(0)
    k_x, k_wd, k_bd, k_wp, k_bp = jax.random.split(key, 5)

    N, Cin, H, W = 2, 4, 16, 16
    Cout, K = 8, 3
    eps = 1e-5

    x = jax.random.normal(k_x, (N, Cin, H, W), dtype=jnp.float32)

    # Conv parameters (PyTorch layouts), deterministic.
    wdw_oihw = 0.2 * jax.random.normal(k_wd, (Cin, 1, K, K), dtype=jnp.float32)     # depthwise
    bdw = 0.1 * jax.random.normal(k_bd, (Cin,), dtype=jnp.float32)
    wpw_oihw = 0.2 * jax.random.normal(k_wp, (Cout, Cin, 1, 1), dtype=jnp.float32)  # pointwise
    bpw = 0.1 * jax.random.normal(k_bp, (Cout,), dtype=jnp.float32)

    # BatchNorm (eval-mode) parameters, deterministic and non-trivial.
    g1 = 1.0 + 0.10 * jnp.arange(Cin, dtype=jnp.float32)
    be1 = 0.05 * jnp.arange(Cin, dtype=jnp.float32)
    m1 = 0.01 * jnp.arange(Cin, dtype=jnp.float32)
    v1 = 1.0 + 0.02 * jnp.arange(Cin, dtype=jnp.float32)
    g2 = 1.0 + 0.05 * jnp.arange(Cout, dtype=jnp.float32)
    be2 = -0.03 * jnp.arange(Cout, dtype=jnp.float32)
    m2 = 0.02 * jnp.arange(Cout, dtype=jnp.float32)
    v2 = 1.0 + 0.01 * jnp.arange(Cout, dtype=jnp.float32)

    # Host-side BN folding: scale into weights, shift into bias.
    w_dw, b_dw, w_pw, b_pw = _fold_params(
        wdw_oihw, bdw, g1, be1, m1, v1, wpw_oihw, bpw, g2, be2, m2, v2, eps)

    out = depth_separable_conv2d(x, w_dw, b_dw, w_pw, b_pw,
                                 kernel_size=K, padding=1, strip_rows=32,
                                 mxu_dtype=jnp.float32)
    out = jax.block_until_ready(out)

    ref = _reference(x, wdw_oihw, bdw, g1, be1, m1, v1, wpw_oihw, bpw, g2, be2, m2, v2, eps)
    assert out.shape == (N, Cout, H, W), out.shape
    assert jnp.allclose(out, ref, rtol=1e-4, atol=1e-4), float(jnp.max(jnp.abs(out - ref)))

    print("KERNEL_OK")
</pallas_src>

<mosaic_0001>
module attributes {stable_mosaic.version = 11 : i64} {
  func.func @_depthsep_kernel(%arg0: i32, %arg1: i32, %arg2: memref<1x4x16x16xf32, #tpu.memory_space<vmem>>, %arg3: memref<9x4x1xf32, #tpu.memory_space<vmem>>, %arg4: memref<4x1xf32, #tpu.memory_space<vmem>>, %arg5: memref<8x4xf32, #tpu.memory_space<vmem>>, %arg6: memref<8x1xf32, #tpu.memory_space<vmem>>, %arg7: memref<1x8x256xf32, #tpu.memory_space<vmem>>, %arg8: memref<18x4x18xf32, #tpu.memory_space<vmem>>) attributes {dimension_semantics = [#tpu.dimension_semantics<parallel>, #tpu.dimension_semantics<arbitrary>], iteration_bounds = array<i64: 2, 1>, scalar_prefetch = 0 : i64, scratch_operands = 1 : i64, tpu.core_type = #tpu.core_type<tc>, window_params = [{transform_indices = @transform_0, window_bounds = array<i64: 1, 4, 16, 16>}, {pipeline_mode = #tpu.pipeline_mode<synchronous>, transform_indices = @transform_1, window_bounds = array<i64: 9, 4, 1>}, {pipeline_mode = #tpu.pipeline_mode<synchronous>, transform_indices = @transform_2, window_bounds = array<i64: 4, 1>}, {pipeline_mode = #tpu.pipeline_mode<synchronous>, transform_indices = @transform_3, window_bounds = array<i64: 8, 4>}, {pipeline_mode = #tpu.pipeline_mode<synchronous>, transform_indices = @transform_4, window_bounds = array<i64: 8, 1>}, {transform_indices = @transform_5, window_bounds = array<i64: 1, 8, 256>}]} {
    %c0_i32 = arith.constant 0 : i32
    %0 = arith.cmpi eq, %arg1, %c0_i32 : i32
    %1 = arith.extui %0 : i1 to i32
    %c0_i32_0 = arith.constant 0 : i32
    %2 = arith.cmpi ne, %1, %c0_i32_0 : i32
    scf.if %2 {
      %cst_33 = arith.constant 0.000000e+00 : f32
      %123 = vector.broadcast %cst_33 : f32 to vector<18x4x18xf32>
      %c0_34 = arith.constant 0 : index
      %c0_35 = arith.constant 0 : index
      %c0_36 = arith.constant 0 : index
      %124 = vector.load %arg8[%c0_34, %c0_35, %c0_36] : memref<18x4x18xf32, #tpu.memory_space<vmem>>, vector<18x4x18xf32>
      tpu.vector_store %arg8[%c0_34, %c0_35, %c0_36], %123 {strides = array<i32>} : memref<18x4x18xf32, #tpu.memory_space<vmem>>, vector<18x4x18xf32>,
      %c0_37 = arith.constant 0 : index
      %c0_38 = arith.constant 0 : index
      %c0_39 = arith.constant 0 : index
      %c0_40 = arith.constant 0 : index
      %125 = vector.load %arg2[%c0_37, %c0_38, %c0_39, %c0_40] : memref<1x4x16x16xf32, #tpu.memory_space<vmem>>, vector<1x4x16x16xf32>
      %126 = vector.shape_cast %125 : vector<1x4x16x16xf32> to vector<4x16x16xf32>
      %127 = tpu.transpose %126, [1, 0, 2] : vector<4x16x16xf32> -> vector<16x4x16xf32>
      %c1_41 = arith.constant 1 : index
      %c0_42 = arith.constant 0 : index
      %c1_43 = arith.constant 1 : index
      %128 = vector.load %arg8[%c1_41, %c0_42, %c1_43] : memref<18x4x18xf32, #tpu.memory_space<vmem>>, vector<16x4x16xf32>
      tpu.vector_store %arg8[%c1_41, %c0_42, %c1_43], %127 {strides = array<i32>} : memref<18x4x18xf32, #tpu.memory_space<vmem>>, vector<16x4x16xf32>,
    } else {
    }
    %c16_i32 = arith.constant 16 : i32
    %3 = arith.muli %arg1, %c16_i32 : i32
    %4 = tpu.assume_multiple %3, 8 : i32
    %5 = arith.index_cast %4 : i32 to index
    %c0 = arith.constant 0 : index
    %c0_1 = arith.constant 0 : index
    %6 = vector.load %arg8[%5, %c0, %c0_1] : memref<18x4x18xf32, #tpu.memory_space<vmem>>, vector<18x4x18xf32>
    %cst = arith.constant 0.000000e+00 : f32
    %7 = vector.broadcast %cst : f32 to vector<16x4x16xf32>
    %8 = vector.extract_strided_slice %6 {offsets = [0, 0, 0], sizes = [18, 4, 16], strides = [1, 1, 1]} : vector<18x4x18xf32> to vector<18x4x16xf32>
    %9 = vector.extract_strided_slice %8 {offsets = [0, 0, 0], sizes = [16, 4, 16], strides = [1, 1, 1]} : vector<18x4x16xf32> to vector<16x4x16xf32>
    %c0_2 = arith.constant 0 : index
    %c0_3 = arith.constant 0 : index
    %c0_4 = arith.constant 0 : index
    %10 = vector.load %arg3[%c0_2, %c0_3, %c0_4] : memref<9x4x1xf32, #tpu.memory_space<vmem>>, vector<1x4x1xf32>
    %11 = vector.shape_cast %10 : vector<1x4x1xf32> to vector<4x1xf32>
    %12 = vector.shape_cast %11 : vector<4x1xf32> to vector<1x4x1xf32>
    %13 = vector.broadcast %12 : vector<1x4x1xf32> to vector<16x4x16xf32>
    %14 = arith.mulf %9, %13 : vector<16x4x16xf32>
    %15 = arith.addf %7, %14 : vector<16x4x16xf32>
    %16 = vector.extract_strided_slice %8 {offsets = [1, 0, 0], sizes = [16, 4, 16], strides = [1, 1, 1]} : vector<18x4x16xf32> to vector<16x4x16xf32>
    %c3 = arith.constant 3 : index
    %c0_5 = arith.constant 0 : index
    %c0_6 = arith.constant 0 : index
    %17 = vector.load %arg3[%c3, %c0_5, %c0_6] : memref<9x4x1xf32, #tpu.memory_space<vmem>>, vector<1x4x1xf32>
    %18 = vector.shape_cast %17 : vector<1x4x1xf32> to vector<4x1xf32>
    %19 = vector.shape_cast %18 : vector<4x1xf32> to vector<1x4x1xf32>
    %20 = vector.broadcast %19 : vector<1x4x1xf32> to vector<16x4x16xf32>
    %21 = arith.mulf %16, %20 : vector<16x4x16xf32>
    %22 = arith.addf %15, %21 : vector<16x4x16xf32>
    %23 = vector.extract_strided_slice %8 {offsets = [2, 0, 0], sizes = [16, 4, 16], strides = [1, 1, 1]} : vector<18x4x16xf32> to vector<16x4x16xf32>
    %c6 = arith.constant 6 : index
    %c0_7 = arith.constant 0 : index
    %c0_8 = arith.constant 0 : index
    %24 = vector.load %arg3[%c6, %c0_7, %c0_8] : memref<9x4x1xf32, #tpu.memory_space<vmem>>, vector<1x4x1xf32>
    %25 = vector.shape_cast %24 : vector<1x4x1xf32> to vector<4x1xf32>
    %26 = vector.shape_cast %25 : vector<4x1xf32> to vector<1x4x1xf32>
    %27 = vector.broadcast %26 : vector<1x4x1xf32> to vector<16x4x16xf32>
    %28 = arith.mulf %23, %27 : vector<16x4x16xf32>
    %29 = arith.addf %22, %28 : vector<16x4x16xf32>
    %30 = vector.extract_strided_slice %6 {offsets = [0, 0, 1], sizes = [18, 4, 16], strides = [1, 1, 1]} : vector<18x4x18xf32> to vector<18x4x16xf32>
    %31 = vector.extract_strided_slice %30 {offsets = [0, 0, 0], sizes = [16, 4, 16], strides = [1, 1, 1]} : vector<18x4x16xf32> to vector<16x4x16xf32>
    %c1 = arith.constant 1 : index
    %c0_9 = arith.constant 0 : index
    %c0_10 = arith.constant 0 : index
    %32 = vector.load %arg3[%c1, %c0_9, %c0_10] : memref<9x4x1xf32, #tpu.memory_space<vmem>>, vector<1x4x1xf32>
    %33 = vector.shape_cast %32 : vector<1x4x1xf32> to vector<4x1xf32>
    %34 = vector.shape_cast %33 : vector<4x1xf32> to vector<1x4x1xf32>
    %35 = vector.broadcast %34 : vector<1x4x1xf32> to vector<16x4x16xf32>
    %36 = arith.mulf %31, %35 : vector<16x4x16xf32>
    %37 = arith.addf %29, %36 : vector<16x4x16xf32>
    %38 = vector.extract_strided_slice %30 {offsets = [1, 0, 0], sizes = [16, 4, 16], strides = [1, 1, 1]} : vector<18x4x16xf32> to vector<16x4x16xf32>
    %c4 = arith.constant 4 : index
    %c0_11 = arith.constant 0 : index
    %c0_12 = arith.constant 0 : index
    %39 = vector.load %arg3[%c4, %c0_11, %c0_12] : memref<9x4x1xf32, #tpu.memory_space<vmem>>, vector<1x4x1xf32>
    %40 = vector.shape_cast %39 : vector<1x4x1xf32> to vector<4x1xf32>
    %41 = vector.shape_cast %40 : vector<4x1xf32> to vector<1x4x1xf32>
    %42 = vector.broadcast %41 : vector<1x4x1xf32> to vector<16x4x16xf32>
    %43 = arith.mulf %38, %42 : vector<16x4x16xf32>
    %44 = arith.addf %37, %43 : vector<16x4x16xf32>
    %45 = vector.extract_strided_slice %30 {offsets = [2, 0, 0], sizes = [16, 4, 16], strides = [1, 1, 1]} : vector<18x4x16xf32> to vector<16x4x16xf32>
    %c7 = arith.constant 7 : index
    %c0_13 = arith.constant 0 : index
    %c0_14 = arith.constant 0 : index
    %46 = vector.load %arg3[%c7, %c0_13, %c0_14] : memref<9x4x1xf32, #tpu.memory_space<vmem>>, vector<1x4x1xf32>
    %47 = vector.shape_cast %46 : vector<1x4x1xf32> to vector<4x1xf32>
    %48 = vector.shape_cast %47 : vector<4x1xf32> to vector<1x4x1xf32>
    %49 = vector.broadcast %48 : vector<1x4x1xf32> to vector<16x4x16xf32>
    %50 = arith.mulf %45, %49 : vector<16x4x16xf32>
    %51 = arith.addf %44, %50 : vector<16x4x16xf32>
    %52 = vector.extract_strided_slice %6 {offsets = [0, 0, 2], sizes = [18, 4, 16], strides = [1, 1, 1]} : vector<18x4x18xf32> to vector<18x4x16xf32>
    %53 = vector.extract_strided_slice %52 {offsets = [0, 0, 0], sizes = [16, 4, 16], strides = [1, 1, 1]} : vector<18x4x16xf32> to vector<16x4x16xf32>
    %c2 = arith.constant 2 : index
    %c0_15 = arith.constant 0 : index
    %c0_16 = arith.constant 0 : index
    %54 = vector.load %arg3[%c2, %c0_15, %c0_16] : memref<9x4x1xf32, #tpu.memory_space<vmem>>, vector<1x4x1xf32>
    %55 = vector.shape_cast %54 : vector<1x4x1xf32> to vector<4x1xf32>
    %56 = vector.shape_cast %55 : vector<4x1xf32> to vector<1x4x1xf32>
    %57 = vector.broadcast %56 : vector<1x4x1xf32> to vector<16x4x16xf32>
    %58 = arith.mulf %53, %57 : vector<16x4x16xf32>
    %59 = arith.addf %51, %58 : vector<16x4x16xf32>
    %60 = vector.extract_strided_slice %52 {offsets = [1, 0, 0], sizes = [16, 4, 16], strides = [1, 1, 1]} : vector<18x4x16xf32> to vector<16x4x16xf32>
    %c5 = arith.constant 5 : index
    %c0_17 = arith.constant 0 : index
    %c0_18 = arith.constant 0 : index
    %61 = vector.load %arg3[%c5, %c0_17, %c0_18] : memref<9x4x1xf32, #tpu.memory_space<vmem>>, vector<1x4x1xf32>
    %62 = vector.shape_cast %61 : vector<1x4x1xf32> to vector<4x1xf32>
    %63 = vector.shape_cast %62 : vector<4x1xf32> to vector<1x4x1xf32>
    %64 = vector.broadcast %63 : vector<1x4x1xf32> to vector<16x4x16xf32>
    %65 = arith.mulf %60, %64 : vector<16x4x16xf32>
    %66 = arith.addf %59, %65 : vector<16x4x16xf32>
    %67 = vector.extract_strided_slice %52 {offsets = [2, 0, 0], sizes = [16, 4, 16], strides = [1, 1, 1]} : vector<18x4x16xf32> to vector<16x4x16xf32>
    %c8 = arith.constant 8 : index
    %c0_19 = arith.constant 0 : index
    %c0_20 = arith.constant 0 : index
    %68 = vector.load %arg3[%c8, %c0_19, %c0_20] : memref<9x4x1xf32, #tpu.memory_space<vmem>>, vector<1x4x1xf32>
    %69 = vector.shape_cast %68 : vector<1x4x1xf32> to vector<4x1xf32>
    %70 = vector.shape_cast %69 : vector<4x1xf32> to vector<1x4x1xf32>
    %71 = vector.broadcast %70 : vector<1x4x1xf32> to vector<16x4x16xf32>
    %72 = arith.mulf %67, %71 : vector<16x4x16xf32>
    %73 = arith.addf %66, %72 : vector<16x4x16xf32>
    %c0_21 = arith.constant 0 : index
    %c0_22 = arith.constant 0 : index
    %74 = vector.load %arg4[%c0_21, %c0_22] : memref<4x1xf32, #tpu.memory_space<vmem>>, vector<4x1xf32>
    %75 = vector.shape_cast %74 : vector<4x1xf32> to vector<1x4x1xf32>
    %76 = vector.broadcast %75 : vector<1x4x1xf32> to vector<16x4x16xf32>
    %77 = arith.addf %73, %76 : vector<16x4x16xf32>
    %cst_23 = arith.constant 0.000000e+00 : f32
    %78 = vector.broadcast %cst_23 : f32 to vector<16x4x16xf32>
    %79 = arith.maximumf %77, %78 : vector<16x4x16xf32>
    %80 = vector.extract_strided_slice %79 {offsets = [0, 0, 0], sizes = [1, 4, 16], strides = [1, 1, 1]} : vector<16x4x16xf32> to vector<1x4x16xf32>
    %81 = vector.shape_cast %80 : vector<1x4x16xf32> to vector<4x16xf32>
    %82 = vector.extract_strided_slice %79 {offsets = [1, 0, 0], sizes = [1, 4, 16], strides = [1, 1, 1]} : vector<16x4x16xf32> to vector<1x4x16xf32>
    %83 = vector.shape_cast %82 : vector<1x4x16xf32> to vector<4x16xf32>
    %84 = vector.extract_strided_slice %79 {offsets = [2, 0, 0], sizes = [1, 4, 16], strides = [1, 1, 1]} : vector<16x4x16xf32> to vector<1x4x16xf32>
    %85 = vector.shape_cast %84 : vector<1x4x16xf32> to vector<4x16xf32>
    %86 = vector.extract_strided_slice %79 {offsets = [3, 0, 0], sizes = [1, 4, 16], strides = [1, 1, 1]} : vector<16x4x16xf32> to vector<1x4x16xf32>
    %87 = vector.shape_cast %86 : vector<1x4x16xf32> to vector<4x16xf32>
    %88 = vector.extract_strided_slice %79 {offsets = [4, 0, 0], sizes = [1, 4, 16], strides = [1, 1, 1]} : vector<16x4x16xf32> to vector<1x4x16xf32>
    %89 = vector.shape_cast %88 : vector<1x4x16xf32> to vector<4x16xf32>
    %90 = vector.extract_strided_slice %79 {offsets = [5, 0, 0], sizes = [1, 4, 16], strides = [1, 1, 1]} : vector<16x4x16xf32> to vector<1x4x16xf32>
    %91 = vector.shape_cast %90 : vector<1x4x16xf32> to vector<4x16xf32>
    %92 = vector.extract_strided_slice %79 {offsets = [6, 0, 0], sizes = [1, 4, 16], strides = [1, 1, 1]} : vector<16x4x16xf32> to vector<1x4x16xf32>
    %93 = vector.shape_cast %92 : vector<1x4x16xf32> to vector<4x16xf32>
    %94 = vector.extract_strided_slice %79 {offsets = [7, 0, 0], sizes = [1, 4, 16], strides = [1, 1, 1]} : vector<16x4x16xf32> to vector<1x4x16xf32>
    %95 = vector.shape_cast %94 : vector<1x4x16xf32> to vector<4x16xf32>
    %96 = vector.extract_strided_slice %79 {offsets = [8, 0, 0], sizes = [1, 4, 16], strides = [1, 1, 1]} : vector<16x4x16xf32> to vector<1x4x16xf32>
    %97 = vector.shape_cast %96 : vector<1x4x16xf32> to vector<4x16xf32>
    %98 = vector.extract_strided_slice %79 {offsets = [9, 0, 0], sizes = [1, 4, 16], strides = [1, 1, 1]} : vector<16x4x16xf32> to vector<1x4x16xf32>
    %99 = vector.shape_cast %98 : vector<1x4x16xf32> to vector<4x16xf32>
    %100 = vector.extract_strided_slice %79 {offsets = [10, 0, 0], sizes = [1, 4, 16], strides = [1, 1, 1]} : vector<16x4x16xf32> to vector<1x4x16xf32>
    %101 = vector.shape_cast %100 : vector<1x4x16xf32> to vector<4x16xf32>
    %102 = vector.extract_strided_slice %79 {offsets = [11, 0, 0], sizes = [1, 4, 16], strides = [1, 1, 1]} : vector<16x4x16xf32> to vector<1x4x16xf32>
    %103 = vector.shape_cast %102 : vector<1x4x16xf32> to vector<4x16xf32>
    %104 = vector.extract_strided_slice %79 {offsets = [12, 0, 0], sizes = [1, 4, 16], strides = [1, 1, 1]} : vector<16x4x16xf32> to vector<1x4x16xf32>
    %105 = vector.shape_cast %104 : vector<1x4x16xf32> to vector<4x16xf32>
    %106 = vector.extract_strided_slice %79 {offsets = [13, 0, 0], sizes = [1, 4, 16], strides = [1, 1, 1]} : vector<16x4x16xf32> to vector<1x4x16xf32>
    %107 = vector.shape_cast %106 : vector<1x4x16xf32> to vector<4x16xf32>
    %108 = vector.extract_strided_slice %79 {offsets = [14, 0, 0], sizes = [1, 4, 16], strides = [1, 1, 1]} : vector<16x4x16xf32> to vector<1x4x16xf32>
    %109 = vector.shape_cast %108 : vector<1x4x16xf32> to vector<4x16xf32>
    %110 = vector.extract_strided_slice %79 {offsets = [15, 0, 0], sizes = [1, 4, 16], strides = [1, 1, 1]} : vector<16x4x16xf32> to vector<1x4x16xf32>
    %111 = vector.shape_cast %110 : vector<1x4x16xf32> to vector<4x16xf32>
    %112 = tpu.concatenate %81, %83, %85, %87, %89, %91, %93, %95, %97, %99, %101, %103, %105, %107, %109, %111 in 1 : vector<4x16xf32>, vector<4x16xf32>, vector<4x16xf32>, vector<4x16xf32>, vector<4x16xf32>, vector<4x16xf32>, vector<4x16xf32>, vector<4x16xf32>, vector<4x16xf32>, vector<4x16xf32>, vector<4x16xf32>, vector<4x16xf32>, vector<4x16xf32>, vector<4x16xf32>, vector<4x16xf32>, vector<4x16xf32> -> vector<4x256xf32>
    %c0_24 = arith.constant 0 : index
    %c0_25 = arith.constant 0 : index
    %113 = vector.load %arg5[%c0_24, %c0_25] : memref<8x4xf32, #tpu.memory_space<vmem>>, vector<8x4xf32>
    %cst_26 = arith.constant dense<0.000000e+00> : vector<8x256xf32>
    %114 = tpu.matmul %113, %112, %cst_26 {dimension_numbers = #tpu.dot_dimension_numbers<[1], [0], [0], [1], [0, 0, 1, 1], [], []>} : vector<8x4xf32>, vector<4x256xf32>, vector<8x256xf32> -> vector<8x256xf32>
    %c0_27 = arith.constant 0 : index
    %c0_28 = arith.constant 0 : index
    %115 = vector.load %arg6[%c0_27, %c0_28] : memref<8x1xf32, #tpu.memory_space<vmem>>, vector<8x1xf32>
    %116 = vector.broadcast %115 : vector<8x1xf32> to vector<8x256xf32>
    %117 = arith.addf %114, %116 : vector<8x256xf32>
    %cst_29 = arith.constant 0.000000e+00 : f32
    %118 = vector.broadcast %cst_29 : f32 to vector<8x256xf32>
    %119 = arith.maximumf %117, %118 : vector<8x256xf32>
    %c0_30 = arith.constant 0 : index
    %c0_31 = arith.constant 0 : index
    %c0_32 = arith.constant 0 : index
    %120 = vector.load %arg7[%c0_30, %c0_31, %c0_32] : memref<1x8x256xf32, #tpu.memory_space<vmem>>, vector<1x8x256xf32>
    %121 = vector.shape_cast %120 : vector<1x8x256xf32> to vector<8x256xf32>
    %122 = vector.shape_cast %119 : vector<8x256xf32> to vector<1x8x256xf32>
    tpu.vector_store %arg7[%c0_30, %c0_31, %c0_32], %122 {strides = array<i32>} : memref<1x8x256xf32, #tpu.memory_space<vmem>>, vector<1x8x256xf32>,
    return
  }
  func.func @transform_0(%arg0: i32, %arg1: i32) -> (i32, i32, i32, i32) {
    %c0_i32 = arith.constant 0 : i32
    %c0_i32_0 = arith.constant 0 : i32
    %c0_i32_1 = arith.constant 0 : i32
    %c0_i32_2 = arith.constant 0 : i32
    return %arg0, %c0_i32, %c0_i32_0, %c0_i32_1 : i32, i32, i32, i32
  }
  func.func @transform_1(%arg0: i32, %arg1: i32) -> (i32, i32, i32) {
    %c0_i32 = arith.constant 0 : i32
    %c0_i32_0 = arith.constant 0 : i32
    %c0_i32_1 = arith.constant 0 : i32
    %c0_i32_2 = arith.constant 0 : i32
    return %c0_i32, %c0_i32_0, %c0_i32_1 : i32, i32, i32
  }
  func.func @transform_2(%arg0: i32, %arg1: i32) -> (i32, i32) {
    %c0_i32 = arith.constant 0 : i32
    %c0_i32_0 = arith.constant 0 : i32
    %c0_i32_1 = arith.constant 0 : i32
    return %c0_i32, %c0_i32_0 : i32, i32
  }
  func.func @transform_3(%arg0: i32, %arg1: i32) -> (i32, i32) {
    %c0_i32 = arith.constant 0 : i32
    %c0_i32_0 = arith.constant 0 : i32
    %c0_i32_1 = arith.constant 0 : i32
    return %c0_i32, %c0_i32_0 : i32, i32
  }
  func.func @transform_4(%arg0: i32, %arg1: i32) -> (i32, i32) {
    %c0_i32 = arith.constant 0 : i32
    %c0_i32_0 = arith.constant 0 : i32
    %c0_i32_1 = arith.constant 0 : i32
    return %c0_i32, %c0_i32_0 : i32, i32
  }
  func.func @transform_5(%arg0: i32, %arg1: i32) -> (i32, i32, i32) {
    %c0_i32 = arith.constant 0 : i32
    %c0_i32_0 = arith.constant 0 : i32
    return %arg0, %c0_i32, %arg1 : i32, i32, i32
  }
}

</mosaic_0001>

<llo_original>
// kernel: tpu_custom_call.1
$region0: #{tpu_custom_call.1}
  #allocation0 [shape = 'u32[]', space=smem, size = 0x4, offset = 0x4, fixed_abs, tag = 'smem constant byte address 0x4 - core index']
  #allocation1 [shape = 'u32[72,128]{1,0:T(1,128)}', space=vmem, size = 0x9000, scoped, tag = 'internal scratch']
  #allocation2 [shape = 'f32[18,4,18]{2,1,0:T(4,128)}', space=vmem, size = 0x9000, scoped, tag = 'scratch operand']
  %s0 = inlined_call_operand.hbm [shape: f32[2,4,16,16], index: 0, kind: input, shape index: {}]
  %s1 = inlined_call_operand.vmem [shape: f32[9,4,1], index: 1, kind: input, shape index: {}]
  %s2 = inlined_call_operand.vmem [shape: f32[4,1], index: 2, kind: input, shape index: {}]
  %s3 = inlined_call_operand.vmem [shape: f32[8,4], index: 3, kind: input, shape index: {}]
  %s4 = inlined_call_operand.vmem [shape: f32[8,1], index: 4, kind: input, shape index: {}]
  %s5 = inlined_call_operand.hbm [shape: f32[2,8,256], index: 5, kind: output, shape index: {}]
  %s6 = sld [smem:[#allocation0]]
  $region61: #{tpu_custom_call.1} parent=0
    _
  %s8 = ssub.s32 1, %s6
  %s9 = scalar_select 0, %s8, %s6
  $region1: #{tpu_custom_call.1} parent=0
    #allocation3 [shape = 'u8[65536]{0}', space=vmem, size = 0x10000, scoped, tag = 'input window, operand 0']
    #allocation4 [shape = 's32[2]{0}', space=sflag, size = 0x8, scoped, tag = 'scoped memory for tpu_custom_call.1']
    #allocation5 [shape = 's32[2]{0}', space=sflag, size = 0x8, scoped, tag = 'scoped memory for tpu_custom_call.1']
    #allocation6 [shape = 'u8[16384]{0}', space=vmem, size = 0x4000, scoped, tag = 'output window, operand 0']
    %10 = vsyncpa [#allocation4], 0
    %s11 = scalar_lea.sflag [#allocation4], 1
    %12 = vsyncpa %s11, 0
    %13 = vsyncpa [#allocation5], 0
    %s14 = scalar_lea.sflag [#allocation5], 1
    %15 = vsyncpa %s14, 0
    loop: start=0, step=1, limit=4
    $region2: #{tpu_custom_call.1} parent=1 // loop_pre_header
      _
    $region3: #{tpu_custom_call.1} parent=1 // loop_header
      %s17 = sphi 0, %s21
      %p18 = scmp.ge.s32.totalorder %s17, 4
      %s24 = sphi 0, %s36
      %s25 = sphi 0, %s32
      %s26 = sphi 0, %s24
      %s27 = sphi 0, %s25
      %s28 = sphi 0, %s26
      %s29 = sphi 0, %s27
      %s39 = sphi 0, %s41
      %s42 = sphi 0, %s39
      %s43 = sphi 0, %s42
      %s59 = sphi 0, %s43
      %s63 = sphi 0, %s63
      %s65 = sphi 0, %s63
      %s66 = sphi 0, %s65
      %s80 = sphi 0, %s66
      %s84 = sphi 0, %s84
      %s86 = sphi 0, %s84
      %s87 = sphi 0, %s86
      %s101 = sphi 0, %s87
      %s105 = sphi 0, %s105
      %s107 = sphi 0, %s105
      %s108 = sphi 0, %s107
      %s122 = sphi 0, %s108
      %s126 = sphi 0, %s126
      %s128 = sphi 0, %s126
      %s129 = sphi 0, %s128
      %s143 = sphi 0, %s129
      %s151 = sphi 0, %s153
      %s154 = sphi 0, %s151
      %s155 = sphi 0, %s154
      %s171 = sphi 0, %s155
    $region4: #{tpu_custom_call.1} parent=1 // loop_header_branch
      %20 = sbr.rel (%p18) target = $region8
    $region5: #{tpu_custom_call.1} parent=1 // loop_body
      %s22 = ssub.s32 %s17, 1
      %s23 = ssub.s32 %s17, 2
      %s30 = sadd.s32 1, %s25
      %p31 = scmp.ge.s32.totalorder %s30, 1
      %s32 = scalar_select %p31, 0, %s30
      %s33 = sadd.s32 1, %s24
      %s34 = scalar_select %p31, %s33, %s24
      %p35 = scmp.ge.s32.totalorder %s34, 2
      %s36 = scalar_select %p35, 0, %s34
      %s37 = ssub.s32 %s24, %s36
      %p38 = scmp.eq.s32.totalorder %s37, 0
      %s40 = sadd.s32 %s39, 1
      %s41 = scalar_select %p38, %s39, %s40
      %p44 = pneg %p38
      %p45 = scmp.eq.s32.totalorder %s17, 1
      %p46 = por %p44, %p45
      %p47 = scmp.ne.s32.totalorder %s39, %s42
      %p48 = scmp.eq.s32.totalorder %s17, 0
      %p49 = por %p47, %p48
      %p50 = scmp.ne.s32.totalorder %s39, %s42
      %p51 = scmp.eq.s32.totalorder %s22, 1
      %p52 = por %p50, %p51
      %p53 = scmp.ne.s32.totalorder %s42, %s43
      %p54 = scmp.eq.s32.totalorder %s22, 0
      %p55 = por %p53, %p54
      %p56 = scmp.ne.s32.totalorder %s42, %s43
      %p57 = scmp.eq.s32.totalorder %s23, 1
      %p58 = por %p56, %p57
      %p60 = scmp.ne.s32.totalorder %s43, %s59
      %p61 = scmp.eq.s32.totalorder %s23, 0
      %p62 = por %p60, %p61
      %s64 = sadd.s32 %s63, 1
      %p67 = scmp.eq.s32.totalorder %s17, 1
      %p68 = scmp.ne.s32.totalorder %s63, %s65
      %p69 = scmp.eq.s32.totalorder %s17, 0
      %p70 = por %p68, %p69
      %p71 = scmp.ne.s32.totalorder %s63, %s65
      %p72 = scmp.eq.s32.totalorder %s22, 1
      %p73 = por %p71, %p72
      %p74 = scmp.ne.s32.totalorder %s65, %s66
      %p75 = scmp.eq.s32.totalorder %s22, 0
      %p76 = por %p74, %p75
      %p77 = scmp.ne.s32.totalorder %s65, %s66
      %p78 = scmp.eq.s32.totalorder %s23, 1
      %p79 = por %p77, %p78
      %p81 = scmp.ne.s32.totalorder %s66, %s80
      %p82 = scmp.eq.s32.totalorder %s23, 0
      %p83 = por %p81, %p82
      %s85 = sadd.s32 %s84, 1
      %p88 = scmp.eq.s32.totalorder %s17, 1
      %p89 = scmp.ne.s32.totalorder %s84, %s86
      %p90 = scmp.eq.s32.totalorder %s17, 0
      %p91 = por %p89, %p90
      %p92 = scmp.ne.s32.totalorder %s84, %s86
      %p93 = scmp.eq.s32.totalorder %s22, 1
      %p94 = por %p92, %p93
      %p95 = scmp.ne.s32.totalorder %s86, %s87
      %p96 = scmp.eq.s32.totalorder %s22, 0
      %p97 = por %p95, %p96
      %p98 = scmp.ne.s32.totalorder %s86, %s87
      %p99 = scmp.eq.s32.totalorder %s23, 1
      %p100 = por %p98, %p99
      %p102 = scmp.ne.s32.totalorder %s87, %s101
      %p103 = scmp.eq.s32.totalorder %s23, 0
      %p104 = por %p102, %p103
      %s106 = sadd.s32 %s105, 1
      %p109 = scmp.eq.s32.totalorder %s17, 1
      %p110 = scmp.ne.s32.totalorder %s105, %s107
      %p111 = scmp.eq.s32.totalorder %s17, 0
      %p112 = por %p110, %p111
      %p113 = scmp.ne.s32.totalorder %s105, %s107
      %p114 = scmp.eq.s32.totalorder %s22, 1
      %p115 = por %p113, %p114
      %p116 = scmp.ne.s32.totalorder %s107, %s108
      %p117 = scmp.eq.s32.totalorder %s22, 0
      %p118 = por %p116, %p117
      %p119 = scmp.ne.s32.totalorder %s107, %s108
      %p120 = scmp.eq.s32.totalorder %s23, 1
      %p121 = por %p119, %p120
      %p123 = scmp.ne.s32.totalorder %s108, %s122
      %p124 = scmp.eq.s32.totalorder %s23, 0
      %p125 = por %p123, %p124
      %s127 = sadd.s32 %s126, 1
      %p130 = scmp.eq.s32.totalorder %s17, 1
      %p131 = scmp.ne.s32.totalorder %s126, %s128
      %p132 = scmp.eq.s32.totalorder %s17, 0
      %p133 = por %p131, %p132
      %p134 = scmp.ne.s32.totalorder %s126, %s128
      %p135 = scmp.eq.s32.totalorder %s22, 1
      %p136 = por %p134, %p135
      %p137 = scmp.ne.s32.totalorder %s128, %s129
      %p138 = scmp.eq.s32.totalorder %s22, 0
      %p139 = por %p137, %p138
      %p140 = scmp.ne.s32.totalorder %s128, %s129
      %p141 = scmp.eq.s32.totalorder %s23, 1
      %p142 = por %p140, %p141
      %p144 = scmp.ne.s32.totalorder %s129, %s143
      %p145 = scmp.eq.s32.totalorder %s23, 0
      %p146 = por %p144, %p145
      %s147 = ssub.s32 %s24, %s36
      %s148 = ssub.s32 %s25, %s32
      %s149 = sor.u32 %s147, %s148
      %p150 = scmp.eq.s32.totalorder %s149, 0
      %s152 = sadd.s32 %s151, 1
      %s153 = scalar_select %p150, %s151, %s152
      %p156 = pneg %p150
      %p157 = scmp.eq.s32.totalorder %s17, 1
      %p158 = por %p156, %p157
      %p159 = scmp.ne.s32.totalorder %s151, %s154
      %p160 = scmp.eq.s32.totalorder %s17, 0
      %p161 = por %p159, %p160
      %p162 = scmp.ne.s32.totalorder %s151, %s154
      %p163 = scmp.eq.s32.totalorder %s22, 1
      %p164 = por %p162, %p163
      %p165 = scmp.ne.s32.totalorder %s154, %s155
      %p166 = scmp.eq.s32.totalorder %s22, 0
      %p167 = por %p165, %p166
      %p168 = scmp.ne.s32.totalorder %s154, %s155
      %p169 = scmp.eq.s32.totalorder %s23, 1
      %p170 = por %p168, %p169
      %p172 = scmp.ne.s32.totalorder %s155, %s171
      %p173 = scmp.eq.s32.totalorder %s23, 0
      %p174 = por %p172, %p173
      %p175 = scmp.le.s32.totalorder 1, %s17
      %p176 = scmp.lt.s32.totalorder %s17, 3
      %p177 = pnand %p175, %p176
      %p178 = pneg %p177
      // Predicated region
      $region9: #{tpu_custom_call.1} parent=5 // pred_check
        _
      $region10: #{tpu_custom_call.1} parent=5 // pred_check_branch
        %180 = sbr.rel (%p177) target = $region12
      $region11: #{tpu_custom_call.1} parent=5 // pred_region
        %s181 = ssub.s32 %s17, 1
        // Predicated region
        $region13: #{tpu_custom_call.1} parent=11 // pred_check
          %p182 = pneg %p76
        $region14: #{tpu_custom_call.1} parent=11 // pred_check_branch
          %184 = sbr.rel (%p182) target = $region16
        $region15: #{tpu_custom_call.1} parent=11 // pred_region
          _
        $region16: #{tpu_custom_call.1} parent=11 // pred_fallthru
          _
        // Predicated region
        $region17: #{tpu_custom_call.1} parent=11 // pred_check
          %p185 = pneg %p97
        $region18: #{tpu_custom_call.1} parent=11 // pred_check_branch
          %187 = sbr.rel (%p185) target = $region20
        $region19: #{tpu_custom_call.1} parent=11 // pred_region
          _
        $region20: #{tpu_custom_call.1} parent=11 // pred_fallthru
          _
        // Predicated region
        $region21: #{tpu_custom_call.1} parent=11 // pred_check
          %p188 = pneg %p118
        $region22: #{tpu_custom_call.1} parent=11 // pred_check_branch
          %190 = sbr.rel (%p188) target = $region24
        $region23: #{tpu_custom_call.1} parent=11 // pred_region
          _
        $region24: #{tpu_custom_call.1} parent=11 // pred_fallthru
          _
        // Predicated region
        $region25: #{tpu_custom_call.1} parent=11 // pred_check
          %p191 = pneg %p139
        $region26: #{tpu_custom_call.1} parent=11 // pred_check_branch
          %193 = sbr.rel (%p191) target = $region28
        $region27: #{tpu_custom_call.1} parent=11 // pred_region
          _
        $region28: #{tpu_custom_call.1} parent=11 // pred_fallthru
          _
      $region12: #{tpu_custom_call.1} parent=5 // pred_fallthru
        _
      %p194 = scmp.lt.s32.totalorder %s17, 2
      // Predicated region
      $region29: #{tpu_custom_call.1} parent=5 // pred_check
        %p195 = pneg %p194
      $region30: #{tpu_custom_call.1} parent=5 // pred_check_branch
        %197 = sbr.rel (%p195) target = $region32
      $region31: #{tpu_custom_call.1} parent=5 // pred_region
        // Predicated region
        $region33: #{tpu_custom_call.1} parent=31 // pred_check
          %p198 = pneg %p49
        $region34: #{tpu_custom_call.1} parent=31 // pred_check_branch
          %200 = sbr.rel (%p198) target = $region36
        $region35: #{tpu_custom_call.1} parent=31 // pred_region
          %s201 = sand.u32 %s39, 1
          %s202 = scalar_lea.sflag [#allocation4], %s201
          %s203 = sand.u32 %s39, 1
          %s204 = smul.addr %s203, 64
          %s205 = scalar_lea.vmem [#allocation3], %s204
          %207 = vsyncadd %s202, 0
          %s208 = smul.addr %s24, 8
          %s209 = smul.addr %s208, 8
          %s210 = scalar_lea.hbm %s0, %s209
          %s211 = sshll.u32 %s210, 4
          %s212 = int_to_ptr.hbm [resolvable:$true] %s211
          %s213 = sshll.u32 %s205, 4
          %s214 = int_to_ptr.vmem [resolvable:$true] %s213
          %219 = dma.hbm_to_vmem [thread:$0]  %s212, 1024, %s214, %s202, 128, 128, 8
        $region36: #{tpu_custom_call.1} parent=31 // pred_fallthru
          _
      $region32: #{tpu_custom_call.1} parent=5 // pred_fallthru
        _
      %p220 = scmp.le.s32.totalorder 1, %s17
      %p221 = scmp.lt.s32.totalorder %s17, 3
      %p222 = pnand %p220, %p221
      %p223 = pneg %p222
      // Predicated region
      $region37: #{tpu_custom_call.1} parent=5 // pred_check
        _
      $region38: #{tpu_custom_call.1} parent=5 // pred_check_branch
        %225 = sbr.rel (%p222) target = $region40
      $region39: #{tpu_custom_call.1} parent=5 // pred_region
        %s226 = ssub.s32 %s17, 1
        %s227 = sand.u32 %s42, 1
        %s228 = scalar_lea.sflag [#allocation4], %s227
        %s229 = sand.u32 %s42, 1
        %s230 = smul.addr %s229, 64
        %s231 = scalar_lea.vmem [#allocation3], %s230
        // Predicated region
        $region41: #{tpu_custom_call.1} parent=39 // pred_check
          %p232 = pneg %p55
        $region42: #{tpu_custom_call.1} parent=39 // pred_check_branch
          %234 = sbr.rel (%p232) target = $region44
        $region43: #{tpu_custom_call.1} parent=39 // pred_region
          %236 = dma.done %s228, 1024
        $region44: #{tpu_custom_call.1} parent=39 // pred_fallthru
          _
        %s237 = sand.u32 %s42, 1
        %s238 = scalar_lea.sflag [#allocation4], %s237
        %s239 = sand.u32 %s42, 1
        %s240 = smul.addr %s239, 64
        %s241 = scalar_lea.vmem [#allocation3], %s240
        %p242 = pneg %p55
        %p243 = pneg %p52
        %p244 = pneg %p76
        %p245 = pneg %p73
        %p246 = pneg %p97
        %p247 = pneg %p94
        %p248 = pneg %p118
        %p249 = pneg %p115
        %p250 = pneg %p139
        %p251 = pneg %p136
        %p252 = pneg %p167
        %p253 = pneg %p164
        %s254 = sand.u32 %s154, 1
        %s255 = scalar_lea.sflag [#allocation5], %s254
        %s256 = sand.u32 %s154, 1
        %s257 = smul.addr %s256, 16
        %s258 = scalar_lea.vmem [#allocation6], %s257
        %s259 = smul.u32 2, %s27
        %p260 = scmp.eq.s32.totalorder %s27, 0
        // Predicated region
        $region45: #{tpu_custom_call.1} parent=39 // pred_check
          %p261 = pneg %p260
        $region46: #{tpu_custom_call.1} parent=39 // pred_check_branch
          %263 = sbr.rel (%p261) target = $region48
        $region47: #{tpu_custom_call.1} parent=39 // pred_region
          %vm264 = vcmask 142336
          %265 = vst.msk [vmem:[#allocation2] sm:$0xf] %vm264, 0.0
          %266 = vst.msk [vmem:[#allocation2 + $0x4] sm:$0xf] %vm264, 0.0
          %267 = vst.msk [vmem:[#allocation2 + $0x8] sm:$0xf] %vm264, 0.0
          %268 = vst.msk [vmem:[#allocation2 + $0xc] sm:$0xf] %vm264, 0.0
          %269 = vst.msk [vmem:[#allocation2 + $0x10] sm:$0xf] %vm264, 0.0
          %270 = vst.msk [vmem:[#allocation2 + $0x14] sm:$0xf] %vm264, 0.0
          %271 = vst.msk [vmem:[#allocation2 + $0x18] sm:$0xf] %vm264, 0.0
          %272 = vst.msk [vmem:[#allocation2 + $0x1c] sm:$0xf] %vm264, 0.0
          %273 = vst.msk [vmem:[#allocation2 + $0x20] sm:$0xf] %vm264, 0.0
          %274 = vst.msk [vmem:[#allocation2 + $0x24] sm:$0xf] %vm264, 0.0
          %275 = vst.msk [vmem:[#allocation2 + $0x28] sm:$0xf] %vm264, 0.0
          %276 = vst.msk [vmem:[#allocation2 + $0x2c] sm:$0xf] %vm264, 0.0
          %277 = vst.msk [vmem:[#allocation2 + $0x30] sm:$0xf] %vm264, 0.0
          %278 = vst.msk [vmem:[#allocation2 + $0x34] sm:$0xf] %vm264, 0.0
          %279 = vst.msk [vmem:[#allocation2 + $0x38] sm:$0xf] %vm264, 0.0
          %280 = vst.msk [vmem:[#allocation2 + $0x3c] sm:$0xf] %vm264, 0.0
          %281 = vst.msk [vmem:[#allocation2 + $0x40] sm:$0xf] %vm264, 0.0
          %282 = vst.msk [vmem:[#allocation2 + $0x44] sm:$0xf] %vm264, 0.0
          %v283 = vld [vmem:[%s231] sm:$0xff]
          %v284 = vld [vmem:[%s231 + $0x8] sm:$0xff]
          %v285 = vld [vmem:[%s231 + $0x10] sm:$0xff]
          %v286 = vld [vmem:[%s231 + $0x18] sm:$0xff]
          %v287 = vld [vmem:[%s231 + $0x20] sm:$0xff]
          %v288 = vld [vmem:[%s231 + $0x28] sm:$0xff]
          %v289 = vld [vmem:[%s231 + $0x30] sm:$0xff]
          %v290 = vld [vmem:[%s231 + $0x38] sm:$0xff]
          %v291 = vrot.slane %v287, 4
          %vm292 = vcmask 1047556
          %v293 = vsel %vm292, %v291, %v283
          %v294 = vrot.slane %v283, 4
          %v295 = vsel %vm292, %v287, %v294
          %v297 = vunpack.c.l.s4 1983009808
          %v298 = vunpack.c.0.s8 %v297
          %v299 = vperm.slane %v293, %v298
          %v301 = vunpack.c.l.s4 1983009808
          %v302 = vunpack.c.0.s8 %v301
          %v303 = vperm.slane %v295, %v302
          %v304 = vrot.slane %v289, 4
          %v305 = vsel %vm292, %v304, %v285
          %v306 = vrot.slane %v285, 4
          %v307 = vsel %vm292, %v289, %v306
          %v309 = vunpack.c.l.s4 1983009808
          %v310 = vunpack.c.0.s8 %v309
          %v311 = vperm.slane %v305, %v310
          %v313 = vunpack.c.l.s4 1983009808
          %v314 = vunpack.c.0.s8 %v313
          %v315 = vperm.slane %v307, %v314
          %v316 = vrot.slane %v311, 4
          %v317 = vsel %vm292, %v316, %v299
          %v318 = vrot.slane %v299, 4
          %v319 = vsel %vm292, %v311, %v318
          %v321 = vunpack.c.l.s4 1934713408
          %v322 = vunpack.c.0.s8 %v321
          %v323 = vperm.slane %v317, %v322
          %v325 = vunpack.c.l.s4 1934713408
          %v326 = vunpack.c.0.s8 %v325
          %v327 = vperm.slane %v319, %v326
          %v328 = vrot.slane %v315, 4
          %v329 = vsel %vm292, %v328, %v303
          %v330 = vrot.slane %v303, 4
          %v331 = vsel %vm292, %v315, %v330
          %v333 = vunpack.c.l.s4 1934713408
          %v334 = vunpack.c.0.s8 %v333
          %v335 = vperm.slane %v329, %v334
          %v337 = vunpack.c.l.s4 1934713408
          %v338 = vunpack.c.0.s8 %v337
          %v339 = vperm.slane %v331, %v338
          %v340 = vrot.slane %v323, 4
          %v341 = vsel %vm292, 0.0, %v340
          %v342 = vrot.slane %v327, 4
          %v343 = vsel %vm292, 0.0, %v342
          %v344 = vrot.slane %v335, 4
          %v345 = vsel %vm292, 0.0, %v344
          %v346 = vrot.slane %v339, 4
          %v347 = vsel %vm292, 0.0, %v346
          %v348 = vrot.slane %v288, 4
          %v349 = vsel %vm292, %v348, %v284
          %v350 = vrot.slane %v284, 4
          %v351 = vsel %vm292, %v288, %v350
          %v353 = vunpack.c.l.s4 1983009808
          %v354 = vunpack.c.0.s8 %v353
          %v355 = vperm.slane %v349, %v354
          %v357 = vunpack.c.l.s4 1983009808
          %v358 = vunpack.c.0.s8 %v357
          %v359 = vperm.slane %v351, %v358
          %v360 = vrot.slane %v290, 4
          %v361 = vsel %vm292, %v360, %v286
          %v362 = vrot.slane %v286, 4
          %v363 = vsel %vm292, %v290, %v362
          %v365 = vunpack.c.l.s4 1983009808
          %v366 = vunpack.c.0.s8 %v365
          %v367 = vperm.slane %v361, %v366
          %v369 = vunpack.c.l.s4 1983009808
          %v370 = vunpack.c.0.s8 %v369
          %v371 = vperm.slane %v363, %v370
          %v372 = vrot.slane %v367, 4
          %v373 = vsel %vm292, %v372, %v355
          %v374 = vrot.slane %v355, 4
          %v375 = vsel %vm292, %v367, %v374
          %v377 = vunpack.c.l.s4 1934713408
          %v378 = vunpack.c.0.s8 %v377
          %v379 = vperm.slane %v373, %v378
          %v381 = vunpack.c.l.s4 1934713408
          %v382 = vunpack.c.0.s8 %v381
          %v383 = vperm.slane %v375, %v382
          %v384 = vrot.slane %v371, 4
          %v385 = vsel %vm292, %v384, %v359
          %v386 = vrot.slane %v359, 4
          %v387 = vsel %vm292, %v371, %v386
          %v389 = vunpack.c.l.s4 1934713408
          %v390 = vunpack.c.0.s8 %v389
          %v391 = vperm.slane %v385, %v390
          %v393 = vunpack.c.l.s4 1934713408
          %v394 = vunpack.c.0.s8 %v393
          %v395 = vperm.slane %v387, %v394
          %v396 = vrot.slane %v379, 4
          %v397 = vsel %vm292, 0.0, %v396
          %v398 = vrot.slane %v383, 4
          %v399 = vsel %vm292, 0.0, %v398
          %v400 = vrot.slane %v391, 4
          %v401 = vsel %vm292, 0.0, %v400
          %v402 = vrot.slane %v395, 4
          %v403 = vsel %vm292, 0.0, %v402
          %420 = vrot.lane.b32.xlu0 %v323, 1
          %v421 = vpop.permute.xlu0 %420
          %422 = vrot.lane.b32.xlu0 %v341, 1
          %v423 = vpop.permute.xlu0 %422
          %424 = vrot.lane.b32.xlu0 %v327, 1
          %v425 = vpop.permute.xlu0 %424
          %426 = vrot.lane.b32.xlu0 %v343, 1
          %v427 = vpop.permute.xlu0 %426
          %428 = vrot.lane.b32.xlu0 %v335, 1
          %v429 = vpop.permute.xlu0 %428
          %430 = vrot.lane.b32.xlu0 %v345, 1
          %v431 = vpop.permute.xlu0 %430
          %432 = vrot.lane.b32.xlu0 %v339, 1
          %v433 = vpop.permute.xlu0 %432
          %434 = vrot.lane.b32.xlu0 %v347, 1
          %v435 = vpop.permute.xlu0 %434
          %436 = vrot.lane.b32.xlu0 %v379, 1
          %v437 = vpop.permute.xlu0 %436
          %438 = vrot.lane.b32.xlu0 %v397, 1
          %v439 = vpop.permute.xlu0 %438
          %440 = vrot.lane.b32.xlu0 %v383, 1
          %v441 = vpop.permute.xlu0 %440
          %442 = vrot.lane.b32.xlu0 %v399, 1
          %v443 = vpop.permute.xlu0 %442
          %444 = vrot.lane.b32.xlu0 %v391, 1
          %v445 = vpop.permute.xlu0 %444
          %446 = vrot.lane.b32.xlu0 %v401, 1
          %v447 = vpop.permute.xlu0 %446
          %448 = vrot.lane.b32.xlu0 %v395, 1
          %v449 = vpop.permute.xlu0 %448
          %450 = vrot.lane.b32.xlu0 %v403, 1
          %v451 = vpop.permute.xlu0 %450
          %s468 = scalar_lea.vmem [#allocation2], 4
          %vm469 = vcmask 134152
          %470 = vst.msk [vmem:[%s468] sm:$0xf] %vm469, %v421
          %471 = vst.msk [vmem:[%s468 + $0x4] sm:$0xf] %vm469, %v423
          %472 = vst.msk [vmem:[%s468 + $0x8] sm:$0xf] %vm469, %v425
          %473 = vst.msk [vmem:[%s468 + $0xc] sm:$0xf] %vm469, %v427
          %474 = vst.msk [vmem:[%s468 + $0x10] sm:$0xf] %vm469, %v429
          %475 = vst.msk [vmem:[%s468 + $0x14] sm:$0xf] %vm469, %v431
          %476 = vst.msk [vmem:[%s468 + $0x18] sm:$0xf] %vm469, %v433
          %477 = vst.msk [vmem:[%s468 + $0x1c] sm:$0xf] %vm469, %v435
          %478 = vst.msk [vmem:[%s468 + $0x20] sm:$0xf] %vm469, %v437
          %479 = vst.msk [vmem:[%s468 + $0x24] sm:$0xf] %vm469, %v439
          %480 = vst.msk [vmem:[%s468 + $0x28] sm:$0xf] %vm469, %v441
          %481 = vst.msk [vmem:[%s468 + $0x2c] sm:$0xf] %vm469, %v443
          %482 = vst.msk [vmem:[%s468 + $0x30] sm:$0xf] %vm469, %v445
          %483 = vst.msk [vmem:[%s468 + $0x34] sm:$0xf] %vm469, %v447
          %484 = vst.msk [vmem:[%s468 + $0x38] sm:$0xf] %vm469, %v449
          %485 = vst.msk [vmem:[%s468 + $0x3c] sm:$0xf] %vm469, %v451
        $region48: #{tpu_custom_call.1} parent=39 // pred_fallthru
          _
        %s486 = smul.u32 %s27, 16
        %s487 = smul.u32 %s486, 4
        %s488 = scalar_lea.vmem [#allocation2], %s487
        %v489 = vld [vmem:[%s488] sm:$0xf]
        %v490 = vld [vmem:[%s488 + $0x4] sm:$0xf]
        %v491 = vld [vmem:[%s488 + $0x8] sm:$0xf]
        %v492 = vld [vmem:[%s488 + $0xc] sm:$0xf]
        %v493 = vld [vmem:[%s488 + $0x10] sm:$0xf]
        %v494 = vld [vmem:[%s488 + $0x14] sm:$0xf]
        %v495 = vld [vmem:[%s488 + $0x18] sm:$0xf]
        %v496 = vld [vmem:[%s488 + $0x1c] sm:$0xf]
        %v497 = vld [vmem:[%s488 + $0x20] sm:$0xf]
        %v498 = vld [vmem:[%s488 + $0x24] sm:$0xf]
        %v499 = vld [vmem:[%s488 + $0x28] sm:$0xf]
        %v500 = vld [vmem:[%s488 + $0x2c] sm:$0xf]
        %v501 = vld [vmem:[%s488 + $0x30] sm:$0xf]
        %v502 = vld [vmem:[%s488 + $0x34] sm:$0xf]
        %v503 = vld [vmem:[%s488 + $0x38] sm:$0xf]
        %v504 = vld [vmem:[%s488 + $0x3c] sm:$0xf]
        %v505 = vld [vmem:[%s488 + $0x40] sm:$0xf]
        %v506 = vld [vmem:[%s488 + $0x44] sm:$0xf]
        %v507 = vld [vmem:[%s1] sm:$0xf]
        %509 = vset.pattern.permute.xlu0 0
        %510 = vperm.xlu0 %509, %v507
        %v511 = vpop.permute.xlu0 %510
        %v513 = vmul.f32 %v489, %v511
        %v514 = vmul.f32 %v490, %v511
        %v515 = vmul.f32 %v491, %v511
        %v516 = vmul.f32 %v492, %v511
        %v517 = vmul.f32 %v493, %v511
        %v518 = vmul.f32 %v494, %v511
        %v519 = vmul.f32 %v495, %v511
        %v520 = vmul.f32 %v496, %v511
        %v521 = vmul.f32 %v497, %v511
        %v522 = vmul.f32 %v498, %v511
        %v523 = vmul.f32 %v499, %v511
        %v524 = vmul.f32 %v500, %v511
        %v525 = vmul.f32 %v501, %v511
        %v526 = vmul.f32 %v502, %v511
        %v527 = vmul.f32 %v503, %v511
        %v528 = vmul.f32 %v504, %v511
        %v529 = vadd.f32 %v513, 0.0
        %v530 = vadd.f32 %v514, 0.0
        %v531 = vadd.f32 %v515, 0.0
        %v532 = vadd.f32 %v516, 0.0
        %v533 = vadd.f32 %v517, 0.0
        %v534 = vadd.f32 %v518, 0.0
        %v535 = vadd.f32 %v519, 0.0
        %v536 = vadd.f32 %v520, 0.0
        %v537 = vadd.f32 %v521, 0.0
        %v538 = vadd.f32 %v522, 0.0
        %v539 = vadd.f32 %v523, 0.0
        %v540 = vadd.f32 %v524, 0.0
        %v541 = vadd.f32 %v525, 0.0
        %v542 = vadd.f32 %v526, 0.0
        %v543 = vadd.f32 %v527, 0.0
        %v544 = vadd.f32 %v528, 0.0
        %s545 = scalar_lea.vmem %s1, 12
        %v546 = vld [vmem:[%s545] sm:$0xf]
        %548 = vset.pattern.permute.xlu0 0
        %549 = vperm.xlu0 %548, %v546
        %v550 = vpop.permute.xlu0 %549
        %v552 = vmul.f32 %v490, %v550
        %v553 = vmul.f32 %v491, %v550
        %v554 = vmul.f32 %v492, %v550
        %v555 = vmul.f32 %v493, %v550
        %v556 = vmul.f32 %v494, %v550
        %v557 = vmul.f32 %v495, %v550
        %v558 = vmul.f32 %v496, %v550
        %v559 = vmul.f32 %v497, %v550
        %v560 = vmul.f32 %v498, %v550
        %v561 = vmul.f32 %v499, %v550
        %v562 = vmul.f32 %v500, %v550
        %v563 = vmul.f32 %v501, %v550
        %v564 = vmul.f32 %v502, %v550
        %v565 = vmul.f32 %v503, %v550
        %v566 = vmul.f32 %v504, %v550
        %v567 = vmul.f32 %v505, %v550
        %v568 = vadd.f32 %v529, %v552
        %v569 = vadd.f32 %v530, %v553
        %v570 = vadd.f32 %v531, %v554
        %v571 = vadd.f32 %v532, %v555
        %v572 = vadd.f32 %v533, %v556
        %v573 = vadd.f32 %v534, %v557
        %v574 = vadd.f32 %v535, %v558
        %v575 = vadd.f32 %v536, %v559
        %v576 = vadd.f32 %v537, %v560
        %v577 = vadd.f32 %v538, %v561
        %v578 = vadd.f32 %v539, %v562
        %v579 = vadd.f32 %v540, %v563
        %v580 = vadd.f32 %v541, %v564
        %v581 = vadd.f32 %v542, %v565
        %v582 = vadd.f32 %v543, %v566
        %v583 = vadd.f32 %v544, %v567
        %s584 = scalar_lea.vmem %s1, 24
        %v585 = vld [vmem:[%s584] sm:$0xf]
        %587 = vset.pattern.permute.xlu0 0
        %588 = vperm.xlu0 %587, %v585
        %v589 = vpop.permute.xlu0 %588
        %v591 = vmul.f32 %v491, %v589
        %v592 = vmul.f32 %v492, %v589
        %v593 = vmul.f32 %v493, %v589
        %v594 = vmul.f32 %v494, %v589
        %v595 = vmul.f32 %v495, %v589
        %v596 = vmul.f32 %v496, %v589
        %v597 = vmul.f32 %v497, %v589
        %v598 = vmul.f32 %v498, %v589
        %v599 = vmul.f32 %v499, %v589
        %v600 = vmul.f32 %v500, %v589
        %v601 = vmul.f32 %v501, %v589
        %v602 = vmul.f32 %v502, %v589
        %v603 = vmul.f32 %v503, %v589
        %v604 = vmul.f32 %v504, %v589
        %v605 = vmul.f32 %v505, %v589
        %v606 = vmul.f32 %v506, %v589
        %v607 = vadd.f32 %v568, %v591
        %v608 = vadd.f32 %v569, %v592
        %v609 = vadd.f32 %v570, %v593
        %v610 = vadd.f32 %v571, %v594
        %v611 = vadd.f32 %v572, %v595
        %v612 = vadd.f32 %v573, %v596
        %v613 = vadd.f32 %v574, %v597
        %v614 = vadd.f32 %v575, %v598
        %v615 = vadd.f32 %v576, %v599
        %v616 = vadd.f32 %v577, %v600
        %v617 = vadd.f32 %v578, %v601
        %v618 = vadd.f32 %v579, %v602
        %v619 = vadd.f32 %v580, %v603
        %v620 = vadd.f32 %v581, %v604
        %v621 = vadd.f32 %v582, %v605
        %v622 = vadd.f32 %v583, %v606
        %s623 = scalar_lea.vmem %s1, 4
        %v624 = vld [vmem:[%s623] sm:$0xf]
        %626 = vset.pattern.permute.xlu0 0
        %627 = vperm.xlu0 %626, %v624
        %v628 = vpop.permute.xlu0 %627
        %v630 = vmul.f32 %v489, %v628
        %v631 = vmul.f32 %v490, %v628
        %v632 = vmul.f32 %v491, %v628
        %v633 = vmul.f32 %v492, %v628
        %v634 = vmul.f32 %v493, %v628
        %v635 = vmul.f32 %v494, %v628
        %v636 = vmul.f32 %v495, %v628
        %v637 = vmul.f32 %v496, %v628
        %v638 = vmul.f32 %v497, %v628
        %v639 = vmul.f32 %v498, %v628
        %v640 = vmul.f32 %v499, %v628
        %v641 = vmul.f32 %v500, %v628
        %v642 = vmul.f32 %v501, %v628
        %v643 = vmul.f32 %v502, %v628
        %v644 = vmul.f32 %v503, %v628
        %v645 = vmul.f32 %v504, %v628
        %662 = vrot.lane.b32.xlu0 %v630, 127
        %v663 = vpop.permute.xlu0 %662
        %664 = vrot.lane.b32.xlu0 %v631, 127
        %v665 = vpop.permute.xlu0 %664
        %666 = vrot.lane.b32.xlu0 %v632, 127
        %v667 = vpop.permute.xlu0 %666
        %668 = vrot.lane.b32.xlu0 %v633, 127
        %v669 = vpop.permute.xlu0 %668
        %670 = vrot.lane.b32.xlu0 %v634, 127
        %v671 = vpop.permute.xlu0 %670
        %672 = vrot.lane.b32.xlu0 %v635, 127
        %v673 = vpop.permute.xlu0 %672
        %674 = vrot.lane.b32.xlu0 %v636, 127
        %v675 = vpop.permute.xlu0 %674
        %676 = vrot.lane.b32.xlu0 %v637, 127
        %v677 = vpop.permute.xlu0 %676
        %678 = vrot.lane.b32.xlu0 %v638, 127
        %v679 = vpop.permute.xlu0 %678
        %680 = vrot.lane.b32.xlu0 %v639, 127
        %v681 = vpop.permute.xlu0 %680
        %682 = vrot.lane.b32.xlu0 %v640, 127
        %v683 = vpop.permute.xlu0 %682
        %684 = vrot.lane.b32.xlu0 %v641, 127
        %v685 = vpop.permute.xlu0 %684
        %686 = vrot.lane.b32.xlu0 %v642, 127
        %v687 = vpop.permute.xlu0 %686
        %688 = vrot.lane.b32.xlu0 %v643, 127
        %v689 = vpop.permute.xlu0 %688
        %690 = vrot.lane.b32.xlu0 %v644, 127
        %v691 = vpop.permute.xlu0 %690
        %692 = vrot.lane.b32.xlu0 %v645, 127
        %v693 = vpop.permute.xlu0 %692
        %v710 = vadd.f32 %v607, %v663
        %v711 = vadd.f32 %v608, %v665
        %v712 = vadd.f32 %v609, %v667
        %v713 = vadd.f32 %v610, %v669
        %v714 = vadd.f32 %v611, %v671
        %v715 = vadd.f32 %v612, %v673
        %v716 = vadd.f32 %v613, %v675
        %v717 = vadd.f32 %v614, %v677
        %v718 = vadd.f32 %v615, %v679
        %v719 = vadd.f32 %v616, %v681
        %v720 = vadd.f32 %v617, %v683
        %v721 = vadd.f32 %v618, %v685
        %v722 = vadd.f32 %v619, %v687
        %v723 = vadd.f32 %v620, %v689
        %v724 = vadd.f32 %v621, %v691
        %v725 = vadd.f32 %v622, %v693
        %s726 = scalar_lea.vmem %s1, 16
        %v727 = vld [vmem:[%s726] sm:$0xf]
        %729 = vset.pattern.permute.xlu0 0
        %730 = vperm.xlu0 %729, %v727
        %v731 = vpop.permute.xlu0 %730
        %v733 = vmul.f32 %v490, %v731
        %v734 = vmul.f32 %v491, %v731
        %v735 = vmul.f32 %v492, %v731
        %v736 = vmul.f32 %v493, %v731
        %v737 = vmul.f32 %v494, %v731
        %v738 = vmul.f32 %v495, %v731
        %v739 = vmul.f32 %v496, %v731
        %v740 = vmul.f32 %v497, %v731
        %v741 = vmul.f32 %v498, %v731
        %v742 = vmul.f32 %v499, %v731
        %v743 = vmul.f32 %v500, %v731
        %v744 = vmul.f32 %v501, %v731
        %v745 = vmul.f32 %v502, %v731
        %v746 = vmul.f32 %v503, %v731
        %v747 = vmul.f32 %v504, %v731
        %v748 = vmul.f32 %v505, %v731
        %765 = vrot.lane.b32.xlu0 %v733, 127
        %v766 = vpop.permute.xlu0 %765
        %767 = vrot.lane.b32.xlu0 %v734, 127
        %v768 = vpop.permute.xlu0 %767
        %769 = vrot.lane.b32.xlu0 %v735, 127
        %v770 = vpop.permute.xlu0 %769
        %771 = vrot.lane.b32.xlu0 %v736, 127
        %v772 = vpop.permute.xlu0 %771
        %773 = vrot.lane.b32.xlu0 %v737, 127
        %v774 = vpop.permute.xlu0 %773
        %775 = vrot.lane.b32.xlu0 %v738, 127
        %v776 = vpop.permute.xlu0 %775
        %777 = vrot.lane.b32.xlu0 %v739, 127
        %v778 = vpop.permute.xlu0 %777
        %779 = vrot.lane.b32.xlu0 %v740, 127
        %v780 = vpop.permute.xlu0 %779
        %781 = vrot.lane.b32.xlu0 %v741, 127
        %v782 = vpop.permute.xlu0 %781
        %783 = vrot.lane.b32.xlu0 %v742, 127
        %v784 = vpop.permute.xlu0 %783
        %785 = vrot.lane.b32.xlu0 %v743, 127
        %v786 = vpop.permute.xlu0 %785
        %787 = vrot.lane.b32.xlu0 %v744, 127
        %v788 = vpop.permute.xlu0 %787
        %789 = vrot.lane.b32.xlu0 %v745, 127
        %v790 = vpop.permute.xlu0 %789
        %791 = vrot.lane.b32.xlu0 %v746, 127
        %v792 = vpop.permute.xlu0 %791
        %793 = vrot.lane.b32.xlu0 %v747, 127
        %v794 = vpop.permute.xlu0 %793
        %795 = vrot.lane.b32.xlu0 %v748, 127
        %v796 = vpop.permute.xlu0 %795
        %v813 = vadd.f32 %v710, %v766
        %v814 = vadd.f32 %v711, %v768
        %v815 = vadd.f32 %v712, %v770
        %v816 = vadd.f32 %v713, %v772
        %v817 = vadd.f32 %v714, %v774
        %v818 = vadd.f32 %v715, %v776
        %v819 = vadd.f32 %v716, %v778
        %v820 = vadd.f32 %v717, %v780
        %v821 = vadd.f32 %v718, %v782
        %v822 = vadd.f32 %v719, %v784
        %v823 = vadd.f32 %v720, %v786
        %v824 = vadd.f32 %v721, %v788
        %v825 = vadd.f32 %v722, %v790
        %v826 = vadd.f32 %v723, %v792
        %v827 = vadd.f32 %v724, %v794
        %v828 = vadd.f32 %v725, %v796
        %s829 = scalar_lea.vmem %s1, 28
        %v830 = vld [vmem:[%s829] sm:$0xf]
        %832 = vset.pattern.permute.xlu0 0
        %833 = vperm.xlu0 %832, %v830
        %v834 = vpop.permute.xlu0 %833
        %v836 = vmul.f32 %v491, %v834
        %v837 = vmul.f32 %v492, %v834
        %v838 = vmul.f32 %v493, %v834
        %v839 = vmul.f32 %v494, %v834
        %v840 = vmul.f32 %v495, %v834
        %v841 = vmul.f32 %v496, %v834
        %v842 = vmul.f32 %v497, %v834
        %v843 = vmul.f32 %v498, %v834
        %v844 = vmul.f32 %v499, %v834
        %v845 = vmul.f32 %v500, %v834
        %v846 = vmul.f32 %v501, %v834
        %v847 = vmul.f32 %v502, %v834
        %v848 = vmul.f32 %v503, %v834
        %v849 = vmul.f32 %v504, %v834
        %v850 = vmul.f32 %v505, %v834
        %v851 = vmul.f32 %v506, %v834
        %868 = vrot.lane.b32.xlu0 %v836, 127
        %v869 = vpop.permute.xlu0 %868
        %870 = vrot.lane.b32.xlu0 %v837, 127
        %v871 = vpop.permute.xlu0 %870
        %872 = vrot.lane.b32.xlu0 %v838, 127
        %v873 = vpop.permute.xlu0 %872
        %874 = vrot.lane.b32.xlu0 %v839, 127
        %v875 = vpop.permute.xlu0 %874
        %876 = vrot.lane.b32.xlu0 %v840, 127
        %v877 = vpop.permute.xlu0 %876
        %878 = vrot.lane.b32.xlu0 %v841, 127
        %v879 = vpop.permute.xlu0 %878
        %880 = vrot.lane.b32.xlu0 %v842, 127
        %v881 = vpop.permute.xlu0 %880
        %882 = vrot.lane.b32.xlu0 %v843, 127
        %v883 = vpop.permute.xlu0 %882
        %884 = vrot.lane.b32.xlu0 %v844, 127
        %v885 = vpop.permute.xlu0 %884
        %886 = vrot.lane.b32.xlu0 %v845, 127
        %v887 = vpop.permute.xlu0 %886
        %888 = vrot.lane.b32.xlu0 %v846, 127
        %v889 = vpop.permute.xlu0 %888
        %890 = vrot.lane.b32.xlu0 %v847, 127
        %v891 = vpop.permute.xlu0 %890
        %892 = vrot.lane.b32.xlu0 %v848, 127
        %v893 = vpop.permute.xlu0 %892
        %894 = vrot.lane.b32.xlu0 %v849, 127
        %v895 = vpop.permute.xlu0 %894
        %896 = vrot.lane.b32.xlu0 %v850, 127
        %v897 = vpop.permute.xlu0 %896
        %898 = vrot.lane.b32.xlu0 %v851, 127
        %v899 = vpop.permute.xlu0 %898
        %v916 = vadd.f32 %v813, %v869
        %v917 = vadd.f32 %v814, %v871
        %v918 = vadd.f32 %v815, %v873
        %v919 = vadd.f32 %v816, %v875
        %v920 = vadd.f32 %v817, %v877
        %v921 = vadd.f32 %v818, %v879
        %v922 = vadd.f32 %v819, %v881
        %v923 = vadd.f32 %v820, %v883
        %v924 = vadd.f32 %v821, %v885
        %v925 = vadd.f32 %v822, %v887
        %v926 = vadd.f32 %v823, %v889
        %v927 = vadd.f32 %v824, %v891
        %v928 = vadd.f32 %v825, %v893
        %v929 = vadd.f32 %v826, %v895
        %v930 = vadd.f32 %v827, %v897
        %v931 = vadd.f32 %v828, %v899
        %s932 = scalar_lea.vmem %s1, 8
        %v933 = vld [vmem:[%s932] sm:$0xf]
        %935 = vset.pattern.permute.xlu0 0
        %936 = vperm.xlu0 %935, %v933
        %v937 = vpop.permute.xlu0 %936
        %v939 = vmul.f32 %v489, %v937
        %v940 = vmul.f32 %v490, %v937
        %v941 = vmul.f32 %v491, %v937
        %v942 = vmul.f32 %v492, %v937
        %v943 = vmul.f32 %v493, %v937
        %v944 = vmul.f32 %v494, %v937
        %v945 = vmul.f32 %v495, %v937
        %v946 = vmul.f32 %v496, %v937
        %v947 = vmul.f32 %v497, %v937
        %v948 = vmul.f32 %v498, %v937
        %v949 = vmul.f32 %v499, %v937
        %v950 = vmul.f32 %v500, %v937
        %v951 = vmul.f32 %v501, %v937
        %v952 = vmul.f32 %v502, %v937
        %v953 = vmul.f32 %v503, %v937
        %v954 = vmul.f32 %v504, %v937
        %971 = vrot.lane.b32.xlu0 %v939, 126
        %v972 = vpop.permute.xlu0 %971
        %973 = vrot.lane.b32.xlu0 %v940, 126
        %v974 = vpop.permute.xlu0 %973
        %975 = vrot.lane.b32.xlu0 %v941, 126
        %v976 = vpop.permute.xlu0 %975
        %977 = vrot.lane.b32.xlu0 %v942, 126
        %v978 = vpop.permute.xlu0 %977
        %979 = vrot.lane.b32.xlu0 %v943, 126
        %v980 = vpop.permute.xlu0 %979
        %981 = vrot.lane.b32.xlu0 %v944, 126
        %v982 = vpop.permute.xlu0 %981
        %983 = vrot.lane.b32.xlu0 %v945, 126
        %v984 = vpop.permute.xlu0 %983
        %985 = vrot.lane.b32.xlu0 %v946, 126
        %v986 = vpop.permute.xlu0 %985
        %987 = vrot.lane.b32.xlu0 %v947, 126
        %v988 = vpop.permute.xlu0 %987
        %989 = vrot.lane.b32.xlu0 %v948, 126
        %v990 = vpop.permute.xlu0 %989
        %991 = vrot.lane.b32.xlu0 %v949, 126
        %v992 = vpop.permute.xlu0 %991
        %993 = vrot.lane.b32.xlu0 %v950, 126
        %v994 = vpop.permute.xlu0 %993
        %995 = vrot.lane.b32.xlu0 %v951, 126
        %v996 = vpop.permute.xlu0 %995
        %997 = vrot.lane.b32.xlu0 %v952, 126
        %v998 = vpop.permute.xlu0 %997
        %999 = vrot.lane.b32.xlu0 %v953, 126
        %v1000 = vpop.permute.xlu0 %999
        %1001 = vrot.lane.b32.xlu0 %v954, 126
        %v1002 = vpop.permute.xlu0 %1001
        %v1019 = vadd.f32 %v916, %v972
        %v1020 = vadd.f32 %v917, %v974
        %v1021 = vadd.f32 %v918, %v976
        %v1022 = vadd.f32 %v919, %v978
        %v1023 = vadd.f32 %v920, %v980
        %v1024 = vadd.f32 %v921, %v982
        %v1025 = vadd.f32 %v922, %v984
        %v1026 = vadd.f32 %v923, %v986
        %v1027 = vadd.f32 %v924, %v988
        %v1028 = vadd.f32 %v925, %v990
        %v1029 = vadd.f32 %v926, %v992
        %v1030 = vadd.f32 %v927, %v994
        %v1031 = vadd.f32 %v928, %v996
        %v1032 = vadd.f32 %v929, %v998
        %v1033 = vadd.f32 %v930, %v1000
        %v1034 = vadd.f32 %v931, %v1002
        %s1035 = scalar_lea.vmem %s1, 20
        %v1036 = vld [vmem:[%s1035] sm:$0xf]
        %1038 = vset.pattern.permute.xlu0 0
        %1039 = vperm.xlu0 %1038, %v1036
        %v1040 = vpop.permute.xlu0 %1039
        %v1042 = vmul.f32 %v490, %v1040
        %v1043 = vmul.f32 %v491, %v1040
        %v1044 = vmul.f32 %v492, %v1040
        %v1045 = vmul.f32 %v493, %v1040
        %v1046 = vmul.f32 %v494, %v1040
        %v1047 = vmul.f32 %v495, %v1040
        %v1048 = vmul.f32 %v496, %v1040
        %v1049 = vmul.f32 %v497, %v1040
        %v1050 = vmul.f32 %v498, %v1040
        %v1051 = vmul.f32 %v499, %v1040
        %v1052 = vmul.f32 %v500, %v1040
        %v1053 = vmul.f32 %v501, %v1040
        %v1054 = vmul.f32 %v502, %v1040
        %v1055 = vmul.f32 %v503, %v1040
        %v1056 = vmul.f32 %v504, %v1040
        %v1057 = vmul.f32 %v505, %v1040
        %1074 = vrot.lane.b32.xlu0 %v1042, 126
        %v1075 = vpop.permute.xlu0 %1074
        %1076 = vrot.lane.b32.xlu0 %v1043, 126
        %v1077 = vpop.permute.xlu0 %1076
        %1078 = vrot.lane.b32.xlu0 %v1044, 126
        %v1079 = vpop.permute.xlu0 %1078
        %1080 = vrot.lane.b32.xlu0 %v1045, 126
        %v1081 = vpop.permute.xlu0 %1080
        %1082 = vrot.lane.b32.xlu0 %v1046, 126
        %v1083 = vpop.permute.xlu0 %1082
        %1084 = vrot.lane.b32.xlu0 %v1047, 126
        %v1085 = vpop.permute.xlu0 %1084
        %1086 = vrot.lane.b32.xlu0 %v1048, 126
        %v1087 = vpop.permute.xlu0 %1086
        %1088 = vrot.lane.b32.xlu0 %v1049, 126
        %v1089 = vpop.permute.xlu0 %1088
        %1090 = vrot.lane.b32.xlu0 %v1050, 126
        %v1091 = vpop.permute.xlu0 %1090
        %1092 = vrot.lane.b32.xlu0 %v1051, 126
        %v1093 = vpop.permute.xlu0 %1092
        %1094 = vrot.lane.b32.xlu0 %v1052, 126
        %v1095 = vpop.permute.xlu0 %1094
        %1096 = vrot.lane.b32.xlu0 %v1053, 126
        %v1097 = vpop.permute.xlu0 %1096
        %1098 = vrot.lane.b32.xlu0 %v1054, 126
        %v1099 = vpop.permute.xlu0 %1098
        %1100 = vrot.lane.b32.xlu0 %v1055, 126
        %v1101 = vpop.permute.xlu0 %1100
        %1102 = vrot.lane.b32.xlu0 %v1056, 126
        %v1103 = vpop.permute.xlu0 %1102
        %1104 = vrot.lane.b32.xlu0 %v1057, 126
        %v1105 = vpop.permute.xlu0 %1104
        %v1122 = vadd.f32 %v1019, %v1075
        %v1123 = vadd.f32 %v1020, %v1077
        %v1124 = vadd.f32 %v1021, %v1079
        %v1125 = vadd.f32 %v1022, %v1081
        %v1126 = vadd.f32 %v1023, %v1083
        %v1127 = vadd.f32 %v1024, %v1085
        %v1128 = vadd.f32 %v1025, %v1087
        %v1129 = vadd.f32 %v1026, %v1089
        %v1130 = vadd.f32 %v1027, %v1091
        %v1131 = vadd.f32 %v1028, %v1093
        %v1132 = vadd.f32 %v1029, %v1095
        %v1133 = vadd.f32 %v1030, %v1097
        %v1134 = vadd.f32 %v1031, %v1099
        %v1135 = vadd.f32 %v1032, %v1101
        %v1136 = vadd.f32 %v1033, %v1103
        %v1137 = vadd.f32 %v1034, %v1105
        %s1138 = scalar_lea.vmem %s1, 32
        %v1139 = vld [vmem:[%s1138] sm:$0xf]
        %1141 = vset.pattern.permute.xlu0 0
        %1142 = vperm.xlu0 %1141, %v1139
        %v1143 = vpop.permute.xlu0 %1142
        %v1145 = vmul.f32 %v491, %v1143
        %v1146 = vmul.f32 %v492, %v1143
        %v1147 = vmul.f32 %v493, %v1143
        %v1148 = vmul.f32 %v494, %v1143
        %v1149 = vmul.f32 %v495, %v1143
        %v1150 = vmul.f32 %v496, %v1143
        %v1151 = vmul.f32 %v497, %v1143
        %v1152 = vmul.f32 %v498, %v1143
        %v1153 = vmul.f32 %v499, %v1143
        %v1154 = vmul.f32 %v500, %v1143
        %v1155 = vmul.f32 %v501, %v1143
        %v1156 = vmul.f32 %v502, %v1143
        %v1157 = vmul.f32 %v503, %v1143
        %v1158 = vmul.f32 %v504, %v1143
        %v1159 = vmul.f32 %v505, %v1143
        %v1160 = vmul.f32 %v506, %v1143
        %1177 = vrot.lane.b32.xlu0 %v1145, 126
        %v1178 = vpop.permute.xlu0 %1177
        %1179 = vrot.lane.b32.xlu0 %v1146, 126
        %v1180 = vpop.permute.xlu0 %1179
        %1181 = vrot.lane.b32.xlu0 %v1147, 126
        %v1182 = vpop.permute.xlu0 %1181
        %1183 = vrot.lane.b32.xlu0 %v1148, 126
        %v1184 = vpop.permute.xlu0 %1183
        %1185 = vrot.lane.b32.xlu0 %v1149, 126
        %v1186 = vpop.permute.xlu0 %1185
        %1187 = vrot.lane.b32.xlu0 %v1150, 126
        %v1188 = vpop.permute.xlu0 %1187
        %1189 = vrot.lane.b32.xlu0 %v1151, 126
        %v1190 = vpop.permute.xlu0 %1189
        %1191 = vrot.lane.b32.xlu0 %v1152, 126
        %v1192 = vpop.permute.xlu0 %1191
        %1193 = vrot.lane.b32.xlu0 %v1153, 126
        %v1194 = vpop.permute.xlu0 %1193
        %1195 = vrot.lane.b32.xlu0 %v1154, 126
        %v1196 = vpop.permute.xlu0 %1195
        %1197 = vrot.lane.b32.xlu0 %v1155, 126
        %v1198 = vpop.permute.xlu0 %1197
        %1199 = vrot.lane.b32.xlu0 %v1156, 126
        %v1200 = vpop.permute.xlu0 %1199
        %1201 = vrot.lane.b32.xlu0 %v1157, 126
        %v1202 = vpop.permute.xlu0 %1201
        %1203 = vrot.lane.b32.xlu0 %v1158, 126
        %v1204 = vpop.permute.xlu0 %1203
        %1205 = vrot.lane.b32.xlu0 %v1159, 126
        %v1206 = vpop.permute.xlu0 %1205
        %1207 = vrot.lane.b32.xlu0 %v1160, 126
        %v1208 = vpop.permute.xlu0 %1207
        %v1225 = vadd.f32 %v1122, %v1178
        %v1226 = vadd.f32 %v1123, %v1180
        %v1227 = vadd.f32 %v1124, %v1182
        %v1228 = vadd.f32 %v1125, %v1184
        %v1229 = vadd.f32 %v1126, %v1186
        %v1230 = vadd.f32 %v1127, %v1188
        %v1231 = vadd.f32 %v1128, %v1190
        %v1232 = vadd.f32 %v1129, %v1192
        %v1233 = vadd.f32 %v1130, %v1194
        %v1234 = vadd.f32 %v1131, %v1196
        %v1235 = vadd.f32 %v1132, %v1198
        %v1236 = vadd.f32 %v1133, %v1200
        %v1237 = vadd.f32 %v1134, %v1202
        %v1238 = vadd.f32 %v1135, %v1204
        %v1239 = vadd.f32 %v1136, %v1206
        %v1240 = vadd.f32 %v1137, %v1208
        %v1241 = vld [vmem:[%s2] sm:$0xf]
        %1243 = vset.pattern.permute.xlu0 0
        %1244 = vperm.xlu0 %1243, %v1241
        %v1245 = vpop.permute.xlu0 %1244
        %v1247 = vadd.f32 %v1225, %v1245
        %v1248 = vadd.f32 %v1226, %v1245
        %v1249 = vadd.f32 %v1227, %v1245
        %v1250 = vadd.f32 %v1228, %v1245
        %v1251 = vadd.f32 %v1229, %v1245
        %v1252 = vadd.f32 %v1230, %v1245
        %v1253 = vadd.f32 %v1231, %v1245
        %v1254 = vadd.f32 %v1232, %v1245
        %v1255 = vadd.f32 %v1233, %v1245
        %v1256 = vadd.f32 %v1234, %v1245
        %v1257 = vadd.f32 %v1235, %v1245
        %v1258 = vadd.f32 %v1236, %v1245
        %v1259 = vadd.f32 %v1237, %v1245
        %v1260 = vadd.f32 %v1238, %v1245
        %v1261 = vadd.f32 %v1239, %v1245
        %v1262 = vadd.f32 %v1240, %v1245
        %v1263 = vmax.f32 %v1247, 0.0
        %v1264 = vmax.f32 %v1248, 0.0
        %v1265 = vmax.f32 %v1249, 0.0
        %v1266 = vmax.f32 %v1250, 0.0
        %v1267 = vmax.f32 %v1251, 0.0
        %v1268 = vmax.f32 %v1252, 0.0
        %v1269 = vmax.f32 %v1253, 0.0
        %v1270 = vmax.f32 %v1254, 0.0
        %v1271 = vmax.f32 %v1255, 0.0
        %v1272 = vmax.f32 %v1256, 0.0
        %v1273 = vmax.f32 %v1257, 0.0
        %v1274 = vmax.f32 %v1258, 0.0
        %v1275 = vmax.f32 %v1259, 0.0
        %v1276 = vmax.f32 %v1260, 0.0
        %v1277 = vmax.f32 %v1261, 0.0
        %v1278 = vmax.f32 %v1262, 0.0
        %1280 = vrot.lane.b32.xlu0 %v1264, 16
        %v1281 = vpop.permute.xlu0 %1280
        %1284 = vrot.lane.b32.xlu0 %v1265, 32
        %v1285 = vpop.permute.xlu0 %1284
        %1288 = vrot.lane.b32.xlu0 %v1266, 48
        %v1289 = vpop.permute.xlu0 %1288
        %1292 = vrot.lane.b32.xlu0 %v1267, 64
        %v1293 = vpop.permute.xlu0 %1292
        %1296 = vrot.lane.b32.xlu0 %v1268, 80
        %v1297 = vpop.permute.xlu0 %1296
        %1300 = vrot.lane.b32.xlu0 %v1269, 96
        %v1301 = vpop.permute.xlu0 %1300
        %1304 = vrot.lane.b32.xlu0 %v1270, 112
        %v1305 = vpop.permute.xlu0 %1304
        %1308 = vrot.lane.b32.xlu0 %v1272, 16
        %v1309 = vpop.permute.xlu0 %1308
        %1312 = vrot.lane.b32.xlu0 %v1273, 32
        %v1313 = vpop.permute.xlu0 %1312
        %1316 = vrot.lane.b32.xlu0 %v1274, 48
        %v1317 = vpop.permute.xlu0 %1316
        %1320 = vrot.lane.b32.xlu0 %v1275, 64
        %v1321 = vpop.permute.xlu0 %1320
        %1324 = vrot.lane.b32.xlu0 %v1276, 80
        %v1325 = vpop.permute.xlu0 %1324
        %1328 = vrot.lane.b32.xlu0 %v1277, 96
        %v1329 = vpop.permute.xlu0 %1328
        %1332 = vrot.lane.b32.xlu0 %v1278, 112
        %v1333 = vpop.permute.xlu0 %1332
        %vm1335 = vcmask 130048
        %v1336 = vsel %vm1335, %v1263, %v1281
        %vm1337 = vcmask 261120
        %v1338 = vsel %vm1337, %v1336, %v1285
        %vm1339 = vcmask 392192
        %v1340 = vsel %vm1339, %v1338, %v1289
        %vm1341 = vcmask 523264
        %v1342 = vsel %vm1341, %v1340, %v1293
        %vm1343 = vcmask 654336
        %v1344 = vsel %vm1343, %v1342, %v1297
        %vm1345 = vcmask 785408
        %v1346 = vsel %vm1345, %v1344, %v1301
        %vm1347 = vcmask 916480
        %v1348 = vsel %vm1347, %v1346, %v1305
        %v1349 = vsel %vm1335, %v1271, %v1309
        %v1350 = vsel %vm1337, %v1349, %v1313
        %v1351 = vsel %vm1339, %v1350, %v1317
        %v1352 = vsel %vm1341, %v1351, %v1321
        %v1353 = vsel %vm1343, %v1352, %v1325
        %v1354 = vsel %vm1345, %v1353, %v1329
        %v1355 = vsel %vm1347, %v1354, %v1333
        %v1356 = vld [vmem:[%s3] sm:$0xff]
        %v1357 = vld [vmem:[%s4] sm:$0xff]
        %1359 = vset.pattern.permute.xlu0 0
        %1360 = vperm.xlu0 %1359, %v1357
        %v1361 = vpop.permute.xlu0 %1360
        %vm1363 = vcmask 31744
        %v1365 = vsel %vm1363, %v1356, 0
        %vm1367 = vcmask 1043456
        %v1369 = vsel %vm1367, %v1348, 0
        %v1372 = vsel %vm1367, %v1355, 0
        %1374 = vmatpush.msra.mxu0 0.0
        %1375 = vmatpush.msra.mxu0 0.0
        %1376 = vmatpush.msra.mxu0 0.0
        %1377 = vmatpush.msra.mxu0 0.0
        %1378 = vmatpush.msra.mxu0 0.0
        %1379 = vmatpush.msra.mxu0 0.0
        %1380 = vmatpush.msra.mxu0 0.0
        %1381 = vmatpush.msra.mxu0 0.0
        %1382 = vmatpush.msra.mxu0 0.0
        %1383 = vmatpush.msra.mxu0 0.0
        %1384 = vmatpush.msra.mxu0 0.0
        %1385 = vmatpush.msra.mxu0 0.0
        %1386 = vmatpush.msra.mxu0 0.0
        %1387 = vmatpush.msra.mxu0 0.0
        %1388 = vmatpush.msra.mxu0 0.0
        %1389 = vmatpush.msra.mxu0 %v1369
        %1390 = vmatmul.f32.gmra.mxu0 %v1365
        %v1391 = vpop.f32.mrf.mxu0
        %v1392 = vadd.f32 %v1361, %v1391
        %1393 = vdwg.mxu0
        %1394 = vmatpush.msra.mxu0 0.0
        %1395 = vmatpush.msra.mxu0 0.0
        %1396 = vmatpush.msra.mxu0 0.0
        %1397 = vmatpush.msra.mxu0 0.0
        %1398 = vmatpush.msra.mxu0 0.0
        %1399 = vmatpush.msra.mxu0 0.0
        %1400 = vmatpush.msra.mxu0 0.0
        %1401 = vmatpush.msra.mxu0 0.0
        %1402 = vmatpush.msra.mxu0 0.0
        %1403 = vmatpush.msra.mxu0 0.0
        %1404 = vmatpush.msra.mxu0 0.0
        %1405 = vmatpush.msra.mxu0 0.0
        %1406 = vmatpush.msra.mxu0 0.0
        %1407 = vmatpush.msra.mxu0 0.0
        %1408 = vmatpush.msra.mxu0 0.0
        %1409 = vmatpush.msra.mxu0 %v1372
        %1410 = vmatmul.f32.gmra.mxu0 %v1365
        %v1411 = vpop.f32.mrf.mxu0
        %v1412 = vadd.f32 %v1361, %v1411
        %1413 = vdwg.mxu0
        %v1414 = vmax.f32 %v1392, 0.0
        %v1415 = vmax.f32 %v1412, 0.0
        %1416 = vst [vmem:[%s258] sm:$0xff] %v1414
        %1417 = vst [vmem:[%s258 + $0x8] sm:$0xff] %v1415
        %s1418 = sand.u32 %s154, 1
        %s1419 = scalar_lea.sflag [#allocation5], %s1418
        %s1420 = sand.u32 %s154, 1
        %s1421 = smul.addr %s1420, 16
        %s1422 = scalar_lea.vmem [#allocation6], %s1421
        // Predicated region
        $region49: #{tpu_custom_call.1} parent=39 // pred_check
          %p1423 = pneg %p164
        $region50: #{tpu_custom_call.1} parent=39 // pred_check_branch
          %1425 = sbr.rel (%p1423) target = $region52
        $region51: #{tpu_custom_call.1} parent=39 // pred_region
          %s1426 = smul.u32 2, %s27
          %1428 = vsyncadd %s1419, 0
          %s1429 = smul.addr %s26, 2
          %s1430 = sadd.s32 %s1426, %s1429
          %s1431 = smul.addr %s1430, 8
          %s1432 = scalar_lea.hbm %s5, %s1431
          %s1434 = sshll.u32 %s1422, 4
          %s1435 = int_to_ptr.vmem [resolvable:$true] %s1434
          %s1436 = sshll.u32 %s1432, 4
          %s1437 = int_to_ptr.hbm [resolvable:$true] %s1436
          %1439 = dma.vmem_to_hbm [thread:$0]  %s1435, 256, %s1437, %s1419
        $region52: #{tpu_custom_call.1} parent=39 // pred_fallthru
          _
      $region40: #{tpu_custom_call.1} parent=5 // pred_fallthru
        _
      %p1440 = scmp.le.s32.totalorder 2, %s17
      // Predicated region
      $region53: #{tpu_custom_call.1} parent=5 // pred_check
        %p1441 = pneg %p1440
      $region54: #{tpu_custom_call.1} parent=5 // pred_check_branch
        %1443 = sbr.rel (%p1441) target = $region56
      $region55: #{tpu_custom_call.1} parent=5 // pred_region
        %s1444 = ssub.s32 %s17, 2
        // Predicated region
        $region57: #{tpu_custom_call.1} parent=55 // pred_check
          %p1445 = pneg %p170
        $region58: #{tpu_custom_call.1} parent=55 // pred_check_branch
          %1447 = sbr.rel (%p1445) target = $region60
        $region59: #{tpu_custom_call.1} parent=55 // pred_region
          %s1448 = sand.u32 %s155, 1
          %s1449 = scalar_lea.sflag [#allocation5], %s1448
          %s1450 = sand.u32 %s155, 1
          %s1451 = smul.addr %s1450, 16
          %s1452 = scalar_lea.vmem [#allocation6], %s1451
          %1454 = dma.done %s1449, 256
        $region60: #{tpu_custom_call.1} parent=55 // pred_fallthru
          _
      $region56: #{tpu_custom_call.1} parent=5 // pred_fallthru
        _
    $region6: #{tpu_custom_call.1} parent=1 // loop_footer
      %s21 = sadd.s32 1, %s17
    $region7: #{tpu_custom_call.1} parent=1 // loop_footer_branch
      %16 = sbr.rel target = $region3
    $region8: #{tpu_custom_call.1} parent=1 // loop_exit
      _
    %1455 = vsyncpa [#allocation4], 1
    %s1456 = scalar_lea.sflag [#allocation4], 1
    %1457 = vsyncpa %s1456, 1
    %1458 = vsyncpa [#allocation5], 1
    %s1459 = scalar_lea.sflag [#allocation5], 1
    %1460 = vsyncpa %s1459, 1

</llo_original>
